<compile_context>
chip_gen: v5e
topology: v5e:2x2
jax: 0.10.0
libtpu: 0.0.40
codegen_flags: <defaults>
</compile_context>

<pallas_src>
import math
import functools

import numpy as np
import jax
import jax.numpy as jnp
from jax.experimental import pallas as pl
from jax.experimental.pallas import tpu as pltpu


def _eqconv_kernel(x_ref, w_ref, b_ref, o_ref, xpad_ref, *, K, PAD):
    # x_ref    : (BT, C, H, W)    input dtype   unpadded input batch-tile
    # w_ref    : (O, K*K*C)       bf16          equalized weight, taps (kh, kw, c)
    # b_ref    : (O, 1)           f32           bias
    # o_ref    : (BT, O, HO*WO)   out dtype     lane-dense output
    # xpad_ref : (BT, C, Hp, Wp)  bf16          VMEM scratch: zero-padded slab
    BT, C, H, W = x_ref.shape
    _, _, Hp, Wp = xpad_ref.shape
    HO, WO = Hp - K + 1, Wp - K + 1
    HW = HO * WO
    O = w_ref.shape[0]

    # In-kernel zero padding: zero only the halo strips (perimeter), then copy
    # the interior once, casting to bf16 on the way.  No HBM round trip.
    if PAD > 0:
        zrow = jnp.zeros((BT, C, PAD, Wp), xpad_ref.dtype)
        xpad_ref[:, :, :PAD, :] = zrow
        xpad_ref[:, :, PAD + H:, :] = zrow
        zcol = jnp.zeros((BT, C, Hp, PAD), xpad_ref.dtype)
        xpad_ref[:, :, :, :PAD] = zcol
        xpad_ref[:, :, :, PAD + W:] = zcol
    xpad_ref[:, :, PAD:PAD + H, PAD:PAD + W] = x_ref[...].astype(xpad_ref.dtype)

    w = w_ref[...]          # (O, K*K*C) bf16, tiny
    bias = b_ref[...]       # (O, 1) f32

    # Statically unrolled over the batch tile and the K*K taps: each tap is
    # one accumulating MXU call on a statically shifted view of the padded
    # slab.  The f32 accumulator stays in vregs for the tile sizes used here.
    # TODO(synk): spill the accumulator to a VMEM scratch with pl.when
    #             init/finalize if O_tile * HW_tile * 4B grows past ~128 KiB.
    for bt in range(BT):
        acc = jnp.zeros((O, HW), jnp.float32)
        for kh in range(K):
            for kw in range(K):
                tap = kh * K + kw
                w_tap = w[:, tap * C:(tap + 1) * C]                  # (O, C)
                x_tap = xpad_ref[bt, :, kh:kh + HO, kw:kw + WO]      # (C, HO, WO)
                acc = acc + jnp.dot(w_tap, x_tap.reshape(C, HW),
                                    preferred_element_type=jnp.float32)
        o_ref[bt] = (acc + bias).astype(o_ref.dtype)


def equalized_conv2d(x, weight, bias, *, padding=0, out_dtype=None,
                     max_batch_tile=8):
    """Pallas implementation of EqualizedConv2d.forward.

    x      : (B, C, H, W)  (NCHW, PyTorch convention)
    weight : (O, C, K, K)  raw weight (EqualizedWeight scale applied here)
    bias   : (O,)
    returns: (B, O, HO, WO) in `out_dtype` (default: x.dtype),
             HO = H + 2*padding - K + 1.
    """
    B, C, H, W = x.shape
    O, _, K, _ = weight.shape
    Hp, Wp = H + 2 * padding, W + 2 * padding
    HO, WO = Hp - K + 1, Wp - K + 1
    KKC = K * K * C
    out_dtype = x.dtype if out_dtype is None else jnp.dtype(out_dtype)

    # EqualizedWeight scale folded into the (tiny) weights, taps flattened to
    # (O, K*K*C) in (kh, kw, c) order to match the in-kernel tap slicing.
    c_w = 1.0 / math.sqrt(C * K * K)
    w_flat = (weight * c_w).transpose(0, 2, 3, 1).reshape(O, KKC)
    w_flat = w_flat.astype(jnp.bfloat16)
    b2 = bias.reshape(O, 1).astype(jnp.float32)

    # Pick a batch tile: a divisor of B that (a) keeps per-step VMEM well
    # under the scoped limit and (b) still leaves >= 2 grid steps when B >= 2
    # so both v7x TensorCores get parallel work.
    in_bytes = C * H * W * jnp.dtype(x.dtype).itemsize          # input block
    pad_bytes = C * Hp * Wp * 2                                 # bf16 scratch
    out_bytes = O * HO * WO * out_dtype.itemsize                # output block
    per_batch = 2 * in_bytes + pad_bytes + 2 * out_bytes        # ~double-buffered
    budget = 24 * 1024 * 1024
    max_bt = max(1, min(max_batch_tile, B // 2 if B >= 2 else 1))
    BT = 1
    for cand in range(1, max_bt + 1):
        if B % cand == 0 and cand * per_batch <= budget:
            BT = cand

    kernel = functools.partial(_eqconv_kernel, K=K, PAD=padding)

    out_flat = pl.pallas_call(
        kernel,
        out_shape=jax.ShapeDtypeStruct((B, O, HO * WO), out_dtype),
        grid_spec=pltpu.PrefetchScalarGridSpec(
            num_scalar_prefetch=0,
            grid=(B // BT,),
            in_specs=[
                pl.BlockSpec((BT, C, H, W), lambda b: (b, 0, 0, 0)),
                pl.BlockSpec((O, KKC), lambda b: (0, 0)),
                pl.BlockSpec((O, 1), lambda b: (0, 0)),
            ],
            out_specs=pl.BlockSpec((BT, O, HO * WO), lambda b: (b, 0, 0)),
            scratch_shapes=[pltpu.VMEM((BT, C, Hp, Wp), jnp.bfloat16)],
        ),
        compiler_params=pltpu.CompilerParams(
            dimension_semantics=("parallel",),
            vmem_limit_bytes=64 * 1024 * 1024),
    )(x, w_flat, b2)

    # Splitting the last dim is a free reshape; output stays lane-dense in HBM.
    return out_flat.reshape(B, O, HO, WO)


def ref_equalized_conv2d(x, weight, bias, *, padding=0):
    """Pure-JAX reference matching the PyTorch semantics."""
    C = x.shape[1]
    O, _, K, _ = weight.shape
    c_w = 1.0 / math.sqrt(C * K * K)
    out = jax.lax.conv_general_dilated(
        x, weight * c_w, window_strides=(1, 1),
        padding=[(padding, padding), (padding, padding)],
        dimension_numbers=("NCHW", "OIHW", "NCHW"),
        precision=jax.lax.Precision.HIGHEST)
    return out + bias.reshape(1, O, 1, 1)


if __name__ == "__main__":
    # Small shapes consistent with the module: EqualizedConv2d(4, 16, 3, padding=1).
    B, C, O, H, W, K, PAD = 2, 4, 16, 16, 16, 3, 1

    key = jax.random.PRNGKey(0)
    k1, k2 = jax.random.split(key, 2)
    x = jax.random.normal(k1, (B, C, H, W), jnp.float32)
    # Parameters as in the module's __init__ (randn weight, bias = 1.0):
    weight = jax.random.normal(k2, (O, C, K, K), jnp.float32)
    bias = jnp.ones((O,), jnp.float32)

    out = equalized_conv2d(x, weight, bias, padding=PAD)
    out = jax.block_until_ready(out)

    ref = ref_equalized_conv2d(x, weight, bias, padding=PAD)
    np.testing.assert_allclose(np.asarray(out), np.asarray(ref),
                               rtol=2e-2, atol=2e-2)
    print("KERNEL_OK")
</pallas_src>

<mosaic_0001>
module attributes {stable_mosaic.version = 11 : i64} {
  func.func @_eqconv_kernel(%arg0: i32, %arg1: memref<1x4x16x16xf32, #tpu.memory_space<vmem>>, %arg2: memref<16x36xbf16, #tpu.memory_space<vmem>>, %arg3: memref<16x1xf32, #tpu.memory_space<vmem>>, %arg4: memref<1x16x256xf32, #tpu.memory_space<vmem>>, %arg5: memref<1x4x18x18xbf16, #tpu.memory_space<vmem>>) attributes {dimension_semantics = [#tpu.dimension_semantics<parallel>], iteration_bounds = array<i64: 2>, scalar_prefetch = 0 : i64, scratch_operands = 1 : i64, tpu.core_type = #tpu.core_type<tc>, window_params = [{transform_indices = @transform_0, window_bounds = array<i64: 1, 4, 16, 16>}, {pipeline_mode = #tpu.pipeline_mode<synchronous>, transform_indices = @transform_1, window_bounds = array<i64: 16, 36>}, {pipeline_mode = #tpu.pipeline_mode<synchronous>, transform_indices = @transform_2, window_bounds = array<i64: 16, 1>}, {transform_indices = @transform_3, window_bounds = array<i64: 1, 16, 256>}]} {
    %cst = arith.constant 0.000000e+00 : bf16
    %0 = vector.broadcast %cst : bf16 to vector<1x4x1x18xbf16>
    %c0 = arith.constant 0 : index
    %c0_0 = arith.constant 0 : index
    %c0_1 = arith.constant 0 : index
    %c0_2 = arith.constant 0 : index
    %1 = vector.load %arg5[%c0, %c0_0, %c0_1, %c0_2] : memref<1x4x18x18xbf16, #tpu.memory_space<vmem>>, vector<1x4x1x18xbf16>
    tpu.vector_store %arg5[%c0, %c0_0, %c0_1, %c0_2], %0 {strides = array<i32>} : memref<1x4x18x18xbf16, #tpu.memory_space<vmem>>, vector<1x4x1x18xbf16>,
    %c0_3 = arith.constant 0 : index
    %c0_4 = arith.constant 0 : index
    %c17 = arith.constant 17 : index
    %c0_5 = arith.constant 0 : index
    %2 = vector.load %arg5[%c0_3, %c0_4, %c17, %c0_5] : memref<1x4x18x18xbf16, #tpu.memory_space<vmem>>, vector<1x4x1x18xbf16>
    tpu.vector_store %arg5[%c0_3, %c0_4, %c17, %c0_5], %0 {strides = array<i32>} : memref<1x4x18x18xbf16, #tpu.memory_space<vmem>>, vector<1x4x1x18xbf16>,
    %cst_6 = arith.constant 0.000000e+00 : bf16
    %3 = vector.broadcast %cst_6 : bf16 to vector<1x4x18x1xbf16>
    %c0_7 = arith.constant 0 : index
    %c0_8 = arith.constant 0 : index
    %c0_9 = arith.constant 0 : index
    %c0_10 = arith.constant 0 : index
    %4 = vector.load %arg5[%c0_7, %c0_8, %c0_9, %c0_10] : memref<1x4x18x18xbf16, #tpu.memory_space<vmem>>, vector<1x4x18x1xbf16>
    tpu.vector_store %arg5[%c0_7, %c0_8, %c0_9, %c0_10], %3 {strides = array<i32>} : memref<1x4x18x18xbf16, #tpu.memory_space<vmem>>, vector<1x4x18x1xbf16>,
    %c0_11 = arith.constant 0 : index
    %c0_12 = arith.constant 0 : index
    %c0_13 = arith.constant 0 : index
    %c17_14 = arith.constant 17 : index
    %5 = vector.load %arg5[%c0_11, %c0_12, %c0_13, %c17_14] : memref<1x4x18x18xbf16, #tpu.memory_space<vmem>>, vector<1x4x18x1xbf16>
    tpu.vector_store %arg5[%c0_11, %c0_12, %c0_13, %c17_14], %3 {strides = array<i32>} : memref<1x4x18x18xbf16, #tpu.memory_space<vmem>>, vector<1x4x18x1xbf16>,
    %c0_15 = arith.constant 0 : index
    %c0_16 = arith.constant 0 : index
    %c0_17 = arith.constant 0 : index
    %c0_18 = arith.constant 0 : index
    %6 = vector.load %arg1[%c0_15, %c0_16, %c0_17, %c0_18] : memref<1x4x16x16xf32, #tpu.memory_space<vmem>>, vector<1x4x16x16xf32>
    %7 = arith.truncf %6 : vector<1x4x16x16xf32> to vector<1x4x16x16xbf16>
    %c0_19 = arith.constant 0 : index
    %c0_20 = arith.constant 0 : index
    %c1 = arith.constant 1 : index
    %c1_21 = arith.constant 1 : index
    %8 = vector.load %arg5[%c0_19, %c0_20, %c1, %c1_21] : memref<1x4x18x18xbf16, #tpu.memory_space<vmem>>, vector<1x4x16x16xbf16>
    tpu.vector_store %arg5[%c0_19, %c0_20, %c1, %c1_21], %7 {strides = array<i32>} : memref<1x4x18x18xbf16, #tpu.memory_space<vmem>>, vector<1x4x16x16xbf16>,
    %c0_22 = arith.constant 0 : index
    %c0_23 = arith.constant 0 : index
    %9 = vector.load %arg2[%c0_22, %c0_23] : memref<16x36xbf16, #tpu.memory_space<vmem>>, vector<16x36xbf16>
    %c0_24 = arith.constant 0 : index
    %c0_25 = arith.constant 0 : index
    %10 = vector.load %arg3[%c0_24, %c0_25] : memref<16x1xf32, #tpu.memory_space<vmem>>, vector<16x1xf32>
    %cst_26 = arith.constant 0.000000e+00 : f32
    %11 = vector.broadcast %cst_26 : f32 to vector<16x256xf32>
    %12 = vector.extract_strided_slice %9 {offsets = [0, 0], sizes = [16, 4], strides = [1, 1]} : vector<16x36xbf16> to vector<16x4xbf16>
    %c0_27 = arith.constant 0 : index
    %c0_28 = arith.constant 0 : index
    %c0_29 = arith.constant 0 : index
    %c0_30 = arith.constant 0 : index
    %13 = vector.load %arg5[%c0_27, %c0_28, %c0_29, %c0_30] : memref<1x4x18x18xbf16, #tpu.memory_space<vmem>>, vector<1x4x16x16xbf16>
    %14 = vector.shape_cast %13 : vector<1x4x16x16xbf16> to vector<4x16x16xbf16>
    %15 = vector.shape_cast %14 : vector<4x16x16xbf16> to vector<4x256xbf16>
    %cst_31 = arith.constant dense<0.000000e+00> : vector<16x256xf32>
    %16 = tpu.matmul %12, %15, %cst_31 {dimension_numbers = #tpu.dot_dimension_numbers<[1], [0], [0], [1], [0, 0, 1, 1], [], []>} : vector<16x4xbf16>, vector<4x256xbf16>, vector<16x256xf32> -> vector<16x256xf32>
    %17 = arith.addf %11, %16 : vector<16x256xf32>
    %18 = vector.extract_strided_slice %9 {offsets = [0, 4], sizes = [16, 4], strides = [1, 1]} : vector<16x36xbf16> to vector<16x4xbf16>
    %c0_32 = arith.constant 0 : index
    %c0_33 = arith.constant 0 : index
    %c0_34 = arith.constant 0 : index
    %c1_35 = arith.constant 1 : index
    %19 = vector.load %arg5[%c0_32, %c0_33, %c0_34, %c1_35] : memref<1x4x18x18xbf16, #tpu.memory_space<vmem>>, vector<1x4x16x16xbf16>
    %20 = vector.shape_cast %19 : vector<1x4x16x16xbf16> to vector<4x16x16xbf16>
    %21 = vector.shape_cast %20 : vector<4x16x16xbf16> to vector<4x256xbf16>
    %cst_36 = arith.constant dense<0.000000e+00> : vector<16x256xf32>
    %22 = tpu.matmul %18, %21, %cst_36 {dimension_numbers = #tpu.dot_dimension_numbers<[1], [0], [0], [1], [0, 0, 1, 1], [], []>} : vector<16x4xbf16>, vector<4x256xbf16>, vector<16x256xf32> -> vector<16x256xf32>
    %23 = arith.addf %17, %22 : vector<16x256xf32>
    %24 = vector.extract_strided_slice %9 {offsets = [0, 8], sizes = [16, 4], strides = [1, 1]} : vector<16x36xbf16> to vector<16x4xbf16>
    %c0_37 = arith.constant 0 : index
    %c0_38 = arith.constant 0 : index
    %c0_39 = arith.constant 0 : index
    %c2 = arith.constant 2 : index
    %25 = vector.load %arg5[%c0_37, %c0_38, %c0_39, %c2] : memref<1x4x18x18xbf16, #tpu.memory_space<vmem>>, vector<1x4x16x16xbf16>
    %26 = vector.shape_cast %25 : vector<1x4x16x16xbf16> to vector<4x16x16xbf16>
    %27 = vector.shape_cast %26 : vector<4x16x16xbf16> to vector<4x256xbf16>
    %cst_40 = arith.constant dense<0.000000e+00> : vector<16x256xf32>
    %28 = tpu.matmul %24, %27, %cst_40 {dimension_numbers = #tpu.dot_dimension_numbers<[1], [0], [0], [1], [0, 0, 1, 1], [], []>} : vector<16x4xbf16>, vector<4x256xbf16>, vector<16x256xf32> -> vector<16x256xf32>
    %29 = arith.addf %23, %28 : vector<16x256xf32>
    %30 = vector.extract_strided_slice %9 {offsets = [0, 12], sizes = [16, 4], strides = [1, 1]} : vector<16x36xbf16> to vector<16x4xbf16>
    %c0_41 = arith.constant 0 : index
    %c0_42 = arith.constant 0 : index
    %c1_43 = arith.constant 1 : index
    %c0_44 = arith.constant 0 : index
    %31 = vector.load %arg5[%c0_41, %c0_42, %c1_43, %c0_44] : memref<1x4x18x18xbf16, #tpu.memory_space<vmem>>, vector<1x4x16x16xbf16>
    %32 = vector.shape_cast %31 : vector<1x4x16x16xbf16> to vector<4x16x16xbf16>
    %33 = vector.shape_cast %32 : vector<4x16x16xbf16> to vector<4x256xbf16>
    %cst_45 = arith.constant dense<0.000000e+00> : vector<16x256xf32>
    %34 = tpu.matmul %30, %33, %cst_45 {dimension_numbers = #tpu.dot_dimension_numbers<[1], [0], [0], [1], [0, 0, 1, 1], [], []>} : vector<16x4xbf16>, vector<4x256xbf16>, vector<16x256xf32> -> vector<16x256xf32>
    %35 = arith.addf %29, %34 : vector<16x256xf32>
    %36 = vector.extract_strided_slice %9 {offsets = [0, 16], sizes = [16, 4], strides = [1, 1]} : vector<16x36xbf16> to vector<16x4xbf16>
    %c0_46 = arith.constant 0 : index
    %c0_47 = arith.constant 0 : index
    %c1_48 = arith.constant 1 : index
    %c1_49 = arith.constant 1 : index
    %37 = vector.load %arg5[%c0_46, %c0_47, %c1_48, %c1_49] : memref<1x4x18x18xbf16, #tpu.memory_space<vmem>>, vector<1x4x16x16xbf16>
    %38 = vector.shape_cast %37 : vector<1x4x16x16xbf16> to vector<4x16x16xbf16>
    %39 = vector.shape_cast %38 : vector<4x16x16xbf16> to vector<4x256xbf16>
    %cst_50 = arith.constant dense<0.000000e+00> : vector<16x256xf32>
    %40 = tpu.matmul %36, %39, %cst_50 {dimension_numbers = #tpu.dot_dimension_numbers<[1], [0], [0], [1], [0, 0, 1, 1], [], []>} : vector<16x4xbf16>, vector<4x256xbf16>, vector<16x256xf32> -> vector<16x256xf32>
    %41 = arith.addf %35, %40 : vector<16x256xf32>
    %42 = vector.extract_strided_slice %9 {offsets = [0, 20], sizes = [16, 4], strides = [1, 1]} : vector<16x36xbf16> to vector<16x4xbf16>
    %c0_51 = arith.constant 0 : index
    %c0_52 = arith.constant 0 : index
    %c1_53 = arith.constant 1 : index
    %c2_54 = arith.constant 2 : index
    %43 = vector.load %arg5[%c0_51, %c0_52, %c1_53, %c2_54] : memref<1x4x18x18xbf16, #tpu.memory_space<vmem>>, vector<1x4x16x16xbf16>
    %44 = vector.shape_cast %43 : vector<1x4x16x16xbf16> to vector<4x16x16xbf16>
    %45 = vector.shape_cast %44 : vector<4x16x16xbf16> to vector<4x256xbf16>
    %cst_55 = arith.constant dense<0.000000e+00> : vector<16x256xf32>
    %46 = tpu.matmul %42, %45, %cst_55 {dimension_numbers = #tpu.dot_dimension_numbers<[1], [0], [0], [1], [0, 0, 1, 1], [], []>} : vector<16x4xbf16>, vector<4x256xbf16>, vector<16x256xf32> -> vector<16x256xf32>
    %47 = arith.addf %41, %46 : vector<16x256xf32>
    %48 = vector.extract_strided_slice %9 {offsets = [0, 24], sizes = [16, 4], strides = [1, 1]} : vector<16x36xbf16> to vector<16x4xbf16>
    %c0_56 = arith.constant 0 : index
    %c0_57 = arith.constant 0 : index
    %c2_58 = arith.constant 2 : index
    %c0_59 = arith.constant 0 : index
    %49 = vector.load %arg5[%c0_56, %c0_57, %c2_58, %c0_59] : memref<1x4x18x18xbf16, #tpu.memory_space<vmem>>, vector<1x4x16x16xbf16>
    %50 = vector.shape_cast %49 : vector<1x4x16x16xbf16> to vector<4x16x16xbf16>
    %51 = vector.shape_cast %50 : vector<4x16x16xbf16> to vector<4x256xbf16>
    %cst_60 = arith.constant dense<0.000000e+00> : vector<16x256xf32>
    %52 = tpu.matmul %48, %51, %cst_60 {dimension_numbers = #tpu.dot_dimension_numbers<[1], [0], [0], [1], [0, 0, 1, 1], [], []>} : vector<16x4xbf16>, vector<4x256xbf16>, vector<16x256xf32> -> vector<16x256xf32>
    %53 = arith.addf %47, %52 : vector<16x256xf32>
    %54 = vector.extract_strided_slice %9 {offsets = [0, 28], sizes = [16, 4], strides = [1, 1]} : vector<16x36xbf16> to vector<16x4xbf16>
    %c0_61 = arith.constant 0 : index
    %c0_62 = arith.constant 0 : index
    %c2_63 = arith.constant 2 : index
    %c1_64 = arith.constant 1 : index
    %55 = vector.load %arg5[%c0_61, %c0_62, %c2_63, %c1_64] : memref<1x4x18x18xbf16, #tpu.memory_space<vmem>>, vector<1x4x16x16xbf16>
    %56 = vector.shape_cast %55 : vector<1x4x16x16xbf16> to vector<4x16x16xbf16>
    %57 = vector.shape_cast %56 : vector<4x16x16xbf16> to vector<4x256xbf16>
    %cst_65 = arith.constant dense<0.000000e+00> : vector<16x256xf32>
    %58 = tpu.matmul %54, %57, %cst_65 {dimension_numbers = #tpu.dot_dimension_numbers<[1], [0], [0], [1], [0, 0, 1, 1], [], []>} : vector<16x4xbf16>, vector<4x256xbf16>, vector<16x256xf32> -> vector<16x256xf32>
    %59 = arith.addf %53, %58 : vector<16x256xf32>
    %60 = vector.extract_strided_slice %9 {offsets = [0, 32], sizes = [16, 4], strides = [1, 1]} : vector<16x36xbf16> to vector<16x4xbf16>
    %c0_66 = arith.constant 0 : index
    %c0_67 = arith.constant 0 : index
    %c2_68 = arith.constant 2 : index
    %c2_69 = arith.constant 2 : index
    %61 = vector.load %arg5[%c0_66, %c0_67, %c2_68, %c2_69] : memref<1x4x18x18xbf16, #tpu.memory_space<vmem>>, vector<1x4x16x16xbf16>
    %62 = vector.shape_cast %61 : vector<1x4x16x16xbf16> to vector<4x16x16xbf16>
    %63 = vector.shape_cast %62 : vector<4x16x16xbf16> to vector<4x256xbf16>
    %cst_70 = arith.constant dense<0.000000e+00> : vector<16x256xf32>
    %64 = tpu.matmul %60, %63, %cst_70 {dimension_numbers = #tpu.dot_dimension_numbers<[1], [0], [0], [1], [0, 0, 1, 1], [], []>} : vector<16x4xbf16>, vector<4x256xbf16>, vector<16x256xf32> -> vector<16x256xf32>
    %65 = arith.addf %59, %64 : vector<16x256xf32>
    %66 = vector.broadcast %10 : vector<16x1xf32> to vector<16x256xf32>
    %67 = arith.addf %65, %66 : vector<16x256xf32>
    %c0_71 = arith.constant 0 : index
    %c0_72 = arith.constant 0 : index
    %c0_73 = arith.constant 0 : index
    %68 = vector.load %arg4[%c0_71, %c0_72, %c0_73] : memref<1x16x256xf32, #tpu.memory_space<vmem>>, vector<1x16x256xf32>
    %69 = vector.shape_cast %68 : vector<1x16x256xf32> to vector<16x256xf32>
    %70 = vector.shape_cast %67 : vector<16x256xf32> to vector<1x16x256xf32>
    tpu.vector_store %arg4[%c0_71, %c0_72, %c0_73], %70 {strides = array<i32>} : memref<1x16x256xf32, #tpu.memory_space<vmem>>, vector<1x16x256xf32>,
    return
  }
  func.func @transform_0(%arg0: i32) -> (i32, i32, i32, i32) {
    %c0_i32 = arith.constant 0 : i32
    %c0_i32_0 = arith.constant 0 : i32
    %c0_i32_1 = arith.constant 0 : i32
    %c0_i32_2 = arith.constant 0 : i32
    return %arg0, %c0_i32, %c0_i32_0, %c0_i32_1 : i32, i32, i32, i32
  }
  func.func @transform_1(%arg0: i32) -> (i32, i32) {
    %c0_i32 = arith.constant 0 : i32
    %c0_i32_0 = arith.constant 0 : i32
    %c0_i32_1 = arith.constant 0 : i32
    return %c0_i32, %c0_i32_0 : i32, i32
  }
  func.func @transform_2(%arg0: i32) -> (i32, i32) {
    %c0_i32 = arith.constant 0 : i32
    %c0_i32_0 = arith.constant 0 : i32
    %c0_i32_1 = arith.constant 0 : i32
    return %c0_i32, %c0_i32_0 : i32, i32
  }
  func.func @transform_3(%arg0: i32) -> (i32, i32, i32) {
    %c0_i32 = arith.constant 0 : i32
    %c0_i32_0 = arith.constant 0 : i32
    %c0_i32_1 = arith.constant 0 : i32
    return %arg0, %c0_i32, %c0_i32_0 : i32, i32, i32
  }
}

</mosaic_0001>

<llo_original>
// kernel: tpu_custom_call.1
$region0: #{tpu_custom_call.1}
  #allocation0 [shape = 'u32[]', space=smem, size = 0x4, offset = 0x4, fixed_abs, tag = 'smem constant byte address 0x4 - core index']
  #allocation1 [shape = 'u32[72,128]{1,0:T(1,128)}', space=vmem, size = 0x9000, scoped, tag = 'internal scratch']
  #allocation2 [shape = 'bf16[1,4,18,18]{3,2,1,0:T(8,128)(2,1)}', space=vmem, size = 0x6000, scoped, tag = 'scratch operand']
  %s0 = inlined_call_operand.hbm [shape: f32[2,4,16,16], index: 0, kind: input, shape index: {}]
  %s1 = inlined_call_operand.vmem [shape: bf16[16,36], index: 1, kind: input, shape index: {}]
  %s2 = inlined_call_operand.vmem [shape: f32[16,1], index: 2, kind: input, shape index: {}]
  %s3 = inlined_call_operand.hbm [shape: f32[2,16,256], index: 3, kind: output, shape index: {}]
  %s4 = sld [smem:[#allocation0]]
  $region49: #{tpu_custom_call.1} parent=0
    _
  %s6 = ssub.s32 1, %s4
  %s7 = scalar_select 0, %s6, %s4
  $region1: #{tpu_custom_call.1} parent=0
    #allocation3 [shape = 'u8[65536]{0}', space=vmem, size = 0x10000, scoped, tag = 'input window, operand 0']
    #allocation4 [shape = 's32[2]{0}', space=sflag, size = 0x8, scoped, tag = 'scoped memory for tpu_custom_call.1']
    #allocation5 [shape = 's32[2]{0}', space=sflag, size = 0x8, scoped, tag = 'scoped memory for tpu_custom_call.1']
    #allocation6 [shape = 'u8[32768]{0}', space=vmem, size = 0x8000, scoped, tag = 'output window, operand 0']
    %8 = vsyncpa [#allocation4], 0
    %s9 = scalar_lea.sflag [#allocation4], 1
    %10 = vsyncpa %s9, 0
    %11 = vsyncpa [#allocation5], 0
    %s12 = scalar_lea.sflag [#allocation5], 1
    %13 = vsyncpa %s12, 0
    loop: start=0, step=1, limit=4
    $region2: #{tpu_custom_call.1} parent=1 // loop_pre_header
      _
    $region3: #{tpu_custom_call.1} parent=1 // loop_header
      %s15 = sphi 0, %s19
      %p16 = scmp.ge.s32.totalorder %s15, 4
      %s25 = sphi 0, %s27
      %s28 = sphi 0, %s25
      %s29 = sphi 0, %s28
      %s45 = sphi 0, %s29
      %s49 = sphi 0, %s49
      %s51 = sphi 0, %s49
      %s52 = sphi 0, %s51
      %s66 = sphi 0, %s52
      %s70 = sphi 0, %s70
      %s72 = sphi 0, %s70
      %s73 = sphi 0, %s72
      %s87 = sphi 0, %s73
      %s93 = sphi 0, %s95
      %s96 = sphi 0, %s93
      %s97 = sphi 0, %s96
      %s113 = sphi 0, %s97
    $region4: #{tpu_custom_call.1} parent=1 // loop_header_branch
      %18 = sbr.rel (%p16) target = $region8
    $region5: #{tpu_custom_call.1} parent=1 // loop_body
      %s20 = ssub.s32 %s15, 1
      %s21 = ssub.s32 %s15, 2
      %s22 = sadd.s32 %s15, 1
      %s23 = ssub.s32 %s15, %s22
      %p24 = scmp.eq.s32.totalorder %s23, 0
      %s26 = sadd.s32 %s25, 1
      %s27 = scalar_select %p24, %s25, %s26
      %p30 = pneg %p24
      %p31 = scmp.eq.s32.totalorder %s15, 1
      %p32 = por %p30, %p31
      %p33 = scmp.ne.s32.totalorder %s25, %s28
      %p34 = scmp.eq.s32.totalorder %s15, 0
      %p35 = por %p33, %p34
      %p36 = scmp.ne.s32.totalorder %s25, %s28
      %p37 = scmp.eq.s32.totalorder %s20, 1
      %p38 = por %p36, %p37
      %p39 = scmp.ne.s32.totalorder %s28, %s29
      %p40 = scmp.eq.s32.totalorder %s20, 0
      %p41 = por %p39, %p40
      %p42 = scmp.ne.s32.totalorder %s28, %s29
      %p43 = scmp.eq.s32.totalorder %s21, 1
      %p44 = por %p42, %p43
      %p46 = scmp.ne.s32.totalorder %s29, %s45
      %p47 = scmp.eq.s32.totalorder %s21, 0
      %p48 = por %p46, %p47
      %s50 = sadd.s32 %s49, 1
      %p53 = scmp.eq.s32.totalorder %s15, 1
      %p54 = scmp.ne.s32.totalorder %s49, %s51
      %p55 = scmp.eq.s32.totalorder %s15, 0
      %p56 = por %p54, %p55
      %p57 = scmp.ne.s32.totalorder %s49, %s51
      %p58 = scmp.eq.s32.totalorder %s20, 1
      %p59 = por %p57, %p58
      %p60 = scmp.ne.s32.totalorder %s51, %s52
      %p61 = scmp.eq.s32.totalorder %s20, 0
      %p62 = por %p60, %p61
      %p63 = scmp.ne.s32.totalorder %s51, %s52
      %p64 = scmp.eq.s32.totalorder %s21, 1
      %p65 = por %p63, %p64
      %p67 = scmp.ne.s32.totalorder %s52, %s66
      %p68 = scmp.eq.s32.totalorder %s21, 0
      %p69 = por %p67, %p68
      %s71 = sadd.s32 %s70, 1
      %p74 = scmp.eq.s32.totalorder %s15, 1
      %p75 = scmp.ne.s32.totalorder %s70, %s72
      %p76 = scmp.eq.s32.totalorder %s15, 0
      %p77 = por %p75, %p76
      %p78 = scmp.ne.s32.totalorder %s70, %s72
      %p79 = scmp.eq.s32.totalorder %s20, 1
      %p80 = por %p78, %p79
      %p81 = scmp.ne.s32.totalorder %s72, %s73
      %p82 = scmp.eq.s32.totalorder %s20, 0
      %p83 = por %p81, %p82
      %p84 = scmp.ne.s32.totalorder %s72, %s73
      %p85 = scmp.eq.s32.totalorder %s21, 1
      %p86 = por %p84, %p85
      %p88 = scmp.ne.s32.totalorder %s73, %s87
      %p89 = scmp.eq.s32.totalorder %s21, 0
      %p90 = por %p88, %p89
      %s91 = ssub.s32 %s15, %s22
      %p92 = scmp.eq.s32.totalorder %s91, 0
      %s94 = sadd.s32 %s93, 1
      %s95 = scalar_select %p92, %s93, %s94
      %p98 = pneg %p92
      %p99 = scmp.eq.s32.totalorder %s15, 1
      %p100 = por %p98, %p99
      %p101 = scmp.ne.s32.totalorder %s93, %s96
      %p102 = scmp.eq.s32.totalorder %s15, 0
      %p103 = por %p101, %p102
      %p104 = scmp.ne.s32.totalorder %s93, %s96
      %p105 = scmp.eq.s32.totalorder %s20, 1
      %p106 = por %p104, %p105
      %p107 = scmp.ne.s32.totalorder %s96, %s97
      %p108 = scmp.eq.s32.totalorder %s20, 0
      %p109 = por %p107, %p108
      %p110 = scmp.ne.s32.totalorder %s96, %s97
      %p111 = scmp.eq.s32.totalorder %s21, 1
      %p112 = por %p110, %p111
      %p114 = scmp.ne.s32.totalorder %s97, %s113
      %p115 = scmp.eq.s32.totalorder %s21, 0
      %p116 = por %p114, %p115
      %p117 = scmp.le.s32.totalorder 1, %s15
      %p118 = scmp.lt.s32.totalorder %s15, 3
      %p119 = pnand %p117, %p118
      %p120 = pneg %p119
      // Predicated region
      $region9: #{tpu_custom_call.1} parent=5 // pred_check
        _
      $region10: #{tpu_custom_call.1} parent=5 // pred_check_branch
        %122 = sbr.rel (%p119) target = $region12
      $region11: #{tpu_custom_call.1} parent=5 // pred_region
        %s123 = ssub.s32 %s15, 1
        // Predicated region
        $region13: #{tpu_custom_call.1} parent=11 // pred_check
          %p124 = pneg %p62
        $region14: #{tpu_custom_call.1} parent=11 // pred_check_branch
          %126 = sbr.rel (%p124) target = $region16
        $region15: #{tpu_custom_call.1} parent=11 // pred_region
          _
        $region16: #{tpu_custom_call.1} parent=11 // pred_fallthru
          _
        // Predicated region
        $region17: #{tpu_custom_call.1} parent=11 // pred_check
          %p127 = pneg %p83
        $region18: #{tpu_custom_call.1} parent=11 // pred_check_branch
          %129 = sbr.rel (%p127) target = $region20
        $region19: #{tpu_custom_call.1} parent=11 // pred_region
          _
        $region20: #{tpu_custom_call.1} parent=11 // pred_fallthru
          _
      $region12: #{tpu_custom_call.1} parent=5 // pred_fallthru
        _
      %p130 = scmp.lt.s32.totalorder %s15, 2
      // Predicated region
      $region21: #{tpu_custom_call.1} parent=5 // pred_check
        %p131 = pneg %p130
      $region22: #{tpu_custom_call.1} parent=5 // pred_check_branch
        %133 = sbr.rel (%p131) target = $region24
      $region23: #{tpu_custom_call.1} parent=5 // pred_region
        // Predicated region
        $region25: #{tpu_custom_call.1} parent=23 // pred_check
          %p134 = pneg %p35
        $region26: #{tpu_custom_call.1} parent=23 // pred_check_branch
          %136 = sbr.rel (%p134) target = $region28
        $region27: #{tpu_custom_call.1} parent=23 // pred_region
          %s137 = sand.u32 %s25, 1
          %s138 = scalar_lea.sflag [#allocation4], %s137
          %s139 = sand.u32 %s25, 1
          %s140 = smul.addr %s139, 64
          %s141 = scalar_lea.vmem [#allocation3], %s140
          %143 = vsyncadd %s138, 0
          %s144 = smul.addr %s15, 8
          %s145 = smul.addr %s144, 8
          %s146 = scalar_lea.hbm %s0, %s145
          %s147 = sshll.u32 %s146, 4
          %s148 = int_to_ptr.hbm [resolvable:$true] %s147
          %s149 = sshll.u32 %s141, 4
          %s150 = int_to_ptr.vmem [resolvable:$true] %s149
          %155 = dma.hbm_to_vmem [thread:$0]  %s148, 1024, %s150, %s138, 128, 128, 8
        $region28: #{tpu_custom_call.1} parent=23 // pred_fallthru
          _
      $region24: #{tpu_custom_call.1} parent=5 // pred_fallthru
        _
      %p156 = scmp.le.s32.totalorder 1, %s15
      %p157 = scmp.lt.s32.totalorder %s15, 3
      %p158 = pnand %p156, %p157
      %p159 = pneg %p158
      // Predicated region
      $region29: #{tpu_custom_call.1} parent=5 // pred_check
        _
      $region30: #{tpu_custom_call.1} parent=5 // pred_check_branch
        %161 = sbr.rel (%p158) target = $region32
      $region31: #{tpu_custom_call.1} parent=5 // pred_region
        %s162 = ssub.s32 %s15, 1
        %s163 = sand.u32 %s28, 1
        %s164 = scalar_lea.sflag [#allocation4], %s163
        %s165 = sand.u32 %s28, 1
        %s166 = smul.addr %s165, 64
        %s167 = scalar_lea.vmem [#allocation3], %s166
        // Predicated region
        $region33: #{tpu_custom_call.1} parent=31 // pred_check
          %p168 = pneg %p41
        $region34: #{tpu_custom_call.1} parent=31 // pred_check_branch
          %170 = sbr.rel (%p168) target = $region36
        $region35: #{tpu_custom_call.1} parent=31 // pred_region
          %172 = dma.done %s164, 1024
        $region36: #{tpu_custom_call.1} parent=31 // pred_fallthru
          _
        %s173 = sand.u32 %s28, 1
        %s174 = scalar_lea.sflag [#allocation4], %s173
        %s175 = sand.u32 %s28, 1
        %s176 = smul.addr %s175, 64
        %s177 = scalar_lea.vmem [#allocation3], %s176
        %p178 = pneg %p41
        %p179 = pneg %p38
        %p180 = pneg %p62
        %p181 = pneg %p59
        %p182 = pneg %p83
        %p183 = pneg %p80
        %p184 = pneg %p109
        %p185 = pneg %p106
        %s186 = sand.u32 %s96, 1
        %s187 = scalar_lea.sflag [#allocation5], %s186
        %s188 = sand.u32 %s96, 1
        %s189 = smul.addr %s188, 32
        %s190 = scalar_lea.vmem [#allocation6], %s189
        %vm192 = vcmask 139264
        %vm193 = vsmask.f32 256
        %vm194 = vmand %vm192, %vm193
        %v195 = vld [vmem:[#allocation2] sm:$0x1]
        %v196 = vsel %vm194, 0, %v195
        %197 = vst [vmem:[#allocation2] sm:$0x1] %v196
        %v198 = vld [vmem:[#allocation2 + $0xc] sm:$0x1]
        %v199 = vsel %vm194, 0, %v198
        %200 = vst [vmem:[#allocation2 + $0xc] sm:$0x1] %v199
        %v201 = vld [vmem:[#allocation2 + $0x18] sm:$0x1]
        %v202 = vsel %vm194, 0, %v201
        %203 = vst [vmem:[#allocation2 + $0x18] sm:$0x1] %v202
        %v204 = vld [vmem:[#allocation2 + $0x24] sm:$0x1]
        %v205 = vsel %vm194, 0, %v204
        %206 = vst [vmem:[#allocation2 + $0x24] sm:$0x1] %v205
        %vm207 = vsmask.f32 7938
        %vm208 = vmand %vm192, %vm207
        %v209 = vld [vmem:[#allocation2 + $0x8] sm:$0x1]
        %v210 = vsel %vm208, 0, %v209
        %211 = vst [vmem:[#allocation2 + $0x8] sm:$0x1] %v210
        %v212 = vld [vmem:[#allocation2 + $0x14] sm:$0x1]
        %v213 = vsel %vm208, 0, %v212
        %214 = vst [vmem:[#allocation2 + $0x14] sm:$0x1] %v213
        %v215 = vld [vmem:[#allocation2 + $0x20] sm:$0x1]
        %v216 = vsel %vm208, 0, %v215
        %217 = vst [vmem:[#allocation2 + $0x20] sm:$0x1] %v216
        %v218 = vld [vmem:[#allocation2 + $0x2c] sm:$0x1]
        %v219 = vsel %vm208, 0, %v218
        %220 = vst [vmem:[#allocation2 + $0x2c] sm:$0x1] %v219
        %vm221 = vcmask 3072
        %222 = vst.msk [vmem:[#allocation2] sm:$0xf] %vm221, 0
        %223 = vst.msk [vmem:[#allocation2 + $0x4] sm:$0xf] %vm221, 0
        %vm224 = vcmask 0
        %225 = vst.msk [vmem:[#allocation2 + $0x8] sm:$0x1] %vm224, 0
        %226 = vst.msk [vmem:[#allocation2 + $0xc] sm:$0xf] %vm221, 0
        %227 = vst.msk [vmem:[#allocation2 + $0x10] sm:$0xf] %vm221, 0
        %228 = vst.msk [vmem:[#allocation2 + $0x14] sm:$0x1] %vm224, 0
        %229 = vst.msk [vmem:[#allocation2 + $0x18] sm:$0xf] %vm221, 0
        %230 = vst.msk [vmem:[#allocation2 + $0x1c] sm:$0xf] %vm221, 0
        %231 = vst.msk [vmem:[#allocation2 + $0x20] sm:$0x1] %vm224, 0
        %232 = vst.msk [vmem:[#allocation2 + $0x24] sm:$0xf] %vm221, 0
        %233 = vst.msk [vmem:[#allocation2 + $0x28] sm:$0xf] %vm221, 0
        %234 = vst.msk [vmem:[#allocation2 + $0x2c] sm:$0x1] %vm224, 0
        %vm235 = vcmask 142472
        %236 = vst.msk [vmem:[#allocation2] sm:$0xf] %vm235, 0
        %237 = vst.msk [vmem:[#allocation2 + $0x4] sm:$0xf] %vm235, 0
        %vm238 = vcmask 139400
        %239 = vst.msk [vmem:[#allocation2 + $0x8] sm:$0x1] %vm238, 0
        %240 = vst.msk [vmem:[#allocation2 + $0xc] sm:$0xf] %vm235, 0
        %241 = vst.msk [vmem:[#allocation2 + $0x10] sm:$0xf] %vm235, 0
        %242 = vst.msk [vmem:[#allocation2 + $0x14] sm:$0x1] %vm238, 0
        %243 = vst.msk [vmem:[#allocation2 + $0x18] sm:$0xf] %vm235, 0
        %244 = vst.msk [vmem:[#allocation2 + $0x1c] sm:$0xf] %vm235, 0
        %245 = vst.msk [vmem:[#allocation2 + $0x20] sm:$0x1] %vm238, 0
        %246 = vst.msk [vmem:[#allocation2 + $0x24] sm:$0xf] %vm235, 0
        %247 = vst.msk [vmem:[#allocation2 + $0x28] sm:$0xf] %vm235, 0
        %248 = vst.msk [vmem:[#allocation2 + $0x2c] sm:$0x1] %vm238, 0
        %v249 = vld [vmem:[%s167] sm:$0xff]
        %v250 = vld [vmem:[%s167 + $0x8] sm:$0xff]
        %v251 = vld [vmem:[%s167 + $0x10] sm:$0xff]
        %v252 = vld [vmem:[%s167 + $0x18] sm:$0xff]
        %v253 = vld [vmem:[%s167 + $0x20] sm:$0xff]
        %v254 = vld [vmem:[%s167 + $0x28] sm:$0xff]
        %v255 = vld [vmem:[%s167 + $0x30] sm:$0xff]
        %v256 = vld [vmem:[%s167 + $0x38] sm:$0xff]
        %v257 = vpack.c.bf16 %v249, %v249
        %v258 = vpack.c.bf16 %v250, %v250
        %v259 = vpack.c.bf16 %v251, %v251
        %v260 = vpack.c.bf16 %v252, %v252
        %v261 = vpack.c.bf16 %v253, %v253
        %v262 = vpack.c.bf16 %v254, %v254
        %v263 = vpack.c.bf16 %v255, %v255
        %v264 = vpack.c.bf16 %v256, %v256
        %vm265 = vsmask.f32 4368
        %vm266 = vmor %vm193, %vm265
        %v268 = vshrl.u32 %v257, 16
        %v270 = vrot.slane %v268, 7
        %v271 = vshll.u32 %v257, 16
        %v273 = vor.u32 %v270, %v271
        %v274 = vrot.slane %v270, 4
        %v276 = vshrl.u32 %v258, 16
        %v278 = vrot.slane %v276, 7
        %v279 = vshll.u32 %v258, 16
        %v281 = vor.u32 %v278, %v279
        %v282 = vsel %vm266, %v274, %v281
        %v283 = vrot.slane %v278, 4
        %v285 = vshrl.u32 %v259, 16
        %v287 = vrot.slane %v285, 7
        %v288 = vshll.u32 %v259, 16
        %v290 = vor.u32 %v287, %v288
        %v291 = vrot.slane %v287, 4
        %v293 = vshrl.u32 %v260, 16
        %v295 = vrot.slane %v293, 7
        %v296 = vshll.u32 %v260, 16
        %v298 = vor.u32 %v295, %v296
        %v299 = vsel %vm266, %v291, %v298
        %v300 = vrot.slane %v295, 4
        %v302 = vshrl.u32 %v261, 16
        %v304 = vrot.slane %v302, 7
        %v305 = vshll.u32 %v261, 16
        %v307 = vor.u32 %v304, %v305
        %v308 = vrot.slane %v304, 4
        %v310 = vshrl.u32 %v262, 16
        %v312 = vrot.slane %v310, 7
        %v313 = vshll.u32 %v262, 16
        %v315 = vor.u32 %v312, %v313
        %v316 = vsel %vm266, %v308, %v315
        %v317 = vrot.slane %v312, 4
        %v319 = vshrl.u32 %v263, 16
        %v321 = vrot.slane %v319, 7
        %v322 = vshll.u32 %v263, 16
        %v324 = vor.u32 %v321, %v322
        %v325 = vrot.slane %v321, 4
        %v327 = vshrl.u32 %v264, 16
        %v329 = vrot.slane %v327, 7
        %v330 = vshll.u32 %v264, 16
        %v332 = vor.u32 %v329, %v330
        %v333 = vsel %vm266, %v325, %v332
        %v334 = vrot.slane %v329, 4
        %335 = vrot.lane.b32.xlu0 %v273, 1
        %v336 = vpop.permute.xlu0 %335
        %337 = vrot.lane.b32.xlu0 %v282, 1
        %v338 = vpop.permute.xlu0 %337
        %339 = vrot.lane.b32.xlu0 %v283, 1
        %v340 = vpop.permute.xlu0 %339
        %341 = vrot.lane.b32.xlu0 %v290, 1
        %v342 = vpop.permute.xlu0 %341
        %343 = vrot.lane.b32.xlu0 %v299, 1
        %v344 = vpop.permute.xlu0 %343
        %345 = vrot.lane.b32.xlu0 %v300, 1
        %v346 = vpop.permute.xlu0 %345
        %347 = vrot.lane.b32.xlu0 %v307, 1
        %v348 = vpop.permute.xlu0 %347
        %349 = vrot.lane.b32.xlu0 %v316, 1
        %v350 = vpop.permute.xlu0 %349
        %351 = vrot.lane.b32.xlu0 %v317, 1
        %v352 = vpop.permute.xlu0 %351
        %353 = vrot.lane.b32.xlu0 %v324, 1
        %v354 = vpop.permute.xlu0 %353
        %355 = vrot.lane.b32.xlu0 %v333, 1
        %v356 = vpop.permute.xlu0 %355
        %357 = vrot.lane.b32.xlu0 %v334, 1
        %v358 = vpop.permute.xlu0 %357
        %vm371 = vcmask 134152
        %vm372 = vmand %vm371, %vm207
        %v373 = vld [vmem:[#allocation2] sm:$0xf]
        %v374 = vsel %vm372, %v336, %v373
        %375 = vst [vmem:[#allocation2] sm:$0xf] %v374
        %vm376 = vcmask 134152
        %377 = vst.msk [vmem:[#allocation2 + $0x4] sm:$0xf] %vm376, %v338
        %vm378 = vcmask 131080
        %vm379 = vmand %vm378, %vm193
        %v380 = vld [vmem:[#allocation2 + $0x8] sm:$0x1]
        %v381 = vsel %vm379, %v340, %v380
        %382 = vst [vmem:[#allocation2 + $0x8] sm:$0x1] %v381
        %v383 = vld [vmem:[#allocation2 + $0xc] sm:$0xf]
        %v384 = vsel %vm372, %v342, %v383
        %385 = vst [vmem:[#allocation2 + $0xc] sm:$0xf] %v384
        %386 = vst.msk [vmem:[#allocation2 + $0x10] sm:$0xf] %vm376, %v344
        %v387 = vld [vmem:[#allocation2 + $0x14] sm:$0x1]
        %v388 = vsel %vm379, %v346, %v387
        %389 = vst [vmem:[#allocation2 + $0x14] sm:$0x1] %v388
        %v390 = vld [vmem:[#allocation2 + $0x18] sm:$0xf]
        %v391 = vsel %vm372, %v348, %v390
        %392 = vst [vmem:[#allocation2 + $0x18] sm:$0xf] %v391
        %393 = vst.msk [vmem:[#allocation2 + $0x1c] sm:$0xf] %vm376, %v350
        %v394 = vld [vmem:[#allocation2 + $0x20] sm:$0x1]
        %v395 = vsel %vm379, %v352, %v394
        %396 = vst [vmem:[#allocation2 + $0x20] sm:$0x1] %v395
        %v397 = vld [vmem:[#allocation2 + $0x24] sm:$0xf]
        %v398 = vsel %vm372, %v354, %v397
        %399 = vst [vmem:[#allocation2 + $0x24] sm:$0xf] %v398
        %400 = vst.msk [vmem:[#allocation2 + $0x28] sm:$0xf] %vm376, %v356
        %v401 = vld [vmem:[#allocation2 + $0x2c] sm:$0x1]
        %v402 = vsel %vm379, %v358, %v401
        %403 = vst [vmem:[#allocation2 + $0x2c] sm:$0x1] %v402
        %v404 = vld [vmem:[%s1] sm:$0xf]
        %v405 = vld [vmem:[%s1 + $0x4] sm:$0xf]
        %v406 = vld [vmem:[%s2] sm:$0xff]
        %v407 = vld [vmem:[%s2 + $0x8] sm:$0xff]
        %v408 = vld [vmem:[#allocation2] sm:$0xf]
        %v409 = vld [vmem:[#allocation2 + $0x4] sm:$0xf]
        %v410 = vld [vmem:[#allocation2 + $0xc] sm:$0xf]
        %v411 = vld [vmem:[#allocation2 + $0x10] sm:$0xf]
        %v412 = vld [vmem:[#allocation2 + $0x18] sm:$0xf]
        %v413 = vld [vmem:[#allocation2 + $0x1c] sm:$0xf]
        %v414 = vld [vmem:[#allocation2 + $0x24] sm:$0xf]
        %v415 = vld [vmem:[#allocation2 + $0x28] sm:$0xf]
        %v418 = vpack.i.b16 %v410, %v408
        %v419 = vshrl.u32 %v408, 16
        %v420 = vshrl.u32 %v410, 16
        %v421 = vpack.i.b16 %v420, %v419
        %v424 = vpack.i.b16 %v414, %v412
        %v425 = vshrl.u32 %v412, 16
        %v426 = vshrl.u32 %v414, 16
        %v427 = vpack.i.b16 %v426, %v425
        %v430 = vpack.i.b16 %v411, %v409
        %v431 = vshrl.u32 %v409, 16
        %v432 = vshrl.u32 %v411, 16
        %v433 = vpack.i.b16 %v432, %v431
        %v436 = vpack.i.b16 %v415, %v413
        %v437 = vshrl.u32 %v413, 16
        %v438 = vshrl.u32 %v415, 16
        %v439 = vpack.i.b16 %v438, %v437
        %v442 = vunpack.c.l.s4 1983009808
        %v443 = vunpack.c.0.s8 %v442
        %v444 = vperm.slane %v418, %v443
        %v447 = vunpack.c.l.s4 1983009808
        %v448 = vunpack.c.0.s8 %v447
        %v449 = vperm.slane %v424, %v448
        %v450 = vrot.slane %v449, 4
        %vm451 = vcmask 1047556
        %v452 = vsel %vm451, %v450, %v444
        %v453 = vrot.slane %v444, 4
        %v454 = vsel %vm451, %v449, %v453
        %v456 = vunpack.c.l.s4 1934713408
        %v457 = vunpack.c.0.s8 %v456
        %v458 = vperm.slane %v452, %v457
        %v460 = vunpack.c.l.s4 1934713408
        %v461 = vunpack.c.0.s8 %v460
        %v462 = vperm.slane %v454, %v461
        %v463 = vrot.slane %v458, 4
        %v464 = vsel %vm451, 0, %v463
        %v465 = vrot.slane %v462, 4
        %v466 = vsel %vm451, 0, %v465
        %v469 = vunpack.c.l.s4 1983009808
        %v470 = vunpack.c.0.s8 %v469
        %v471 = vperm.slane %v421, %v470
        %v474 = vunpack.c.l.s4 1983009808
        %v475 = vunpack.c.0.s8 %v474
        %v476 = vperm.slane %v427, %v475
        %v477 = vrot.slane %v476, 4
        %v478 = vsel %vm451, %v477, %v471
        %v479 = vrot.slane %v471, 4
        %v480 = vsel %vm451, %v476, %v479
        %v482 = vunpack.c.l.s4 1934713408
        %v483 = vunpack.c.0.s8 %v482
        %v484 = vperm.slane %v478, %v483
        %v486 = vunpack.c.l.s4 1934713408
        %v487 = vunpack.c.0.s8 %v486
        %v488 = vperm.slane %v480, %v487
        %v489 = vrot.slane %v484, 4
        %v490 = vsel %vm451, 0, %v489
        %v491 = vrot.slane %v488, 4
        %v492 = vsel %vm451, 0, %v491
        %v495 = vunpack.c.l.s4 1983009808
        %v496 = vunpack.c.0.s8 %v495
        %v497 = vperm.slane %v430, %v496
        %v500 = vunpack.c.l.s4 1983009808
        %v501 = vunpack.c.0.s8 %v500
        %v502 = vperm.slane %v436, %v501
        %v503 = vrot.slane %v502, 4
        %v504 = vsel %vm451, %v503, %v497
        %v505 = vrot.slane %v497, 4
        %v506 = vsel %vm451, %v502, %v505
        %v508 = vunpack.c.l.s4 1934713408
        %v509 = vunpack.c.0.s8 %v508
        %v510 = vperm.slane %v504, %v509
        %v512 = vunpack.c.l.s4 1934713408
        %v513 = vunpack.c.0.s8 %v512
        %v514 = vperm.slane %v506, %v513
        %v515 = vrot.slane %v510, 4
        %v516 = vsel %vm451, 0, %v515
        %v517 = vrot.slane %v514, 4
        %v518 = vsel %vm451, 0, %v517
        %v521 = vunpack.c.l.s4 1983009808
        %v522 = vunpack.c.0.s8 %v521
        %v523 = vperm.slane %v433, %v522
        %v526 = vunpack.c.l.s4 1983009808
        %v527 = vunpack.c.0.s8 %v526
        %v528 = vperm.slane %v439, %v527
        %v529 = vrot.slane %v528, 4
        %v530 = vsel %vm451, %v529, %v523
        %v531 = vrot.slane %v523, 4
        %v532 = vsel %vm451, %v528, %v531
        %v534 = vunpack.c.l.s4 1934713408
        %v535 = vunpack.c.0.s8 %v534
        %v536 = vperm.slane %v530, %v535
        %v538 = vunpack.c.l.s4 1934713408
        %v539 = vunpack.c.0.s8 %v538
        %v540 = vperm.slane %v532, %v539
        %v541 = vrot.slane %v536, 4
        %v542 = vsel %vm451, 0, %v541
        %v543 = vrot.slane %v540, 4
        %v544 = vsel %vm451, 0, %v543
        %v546 = vunpack.c.l.b16 %v484
        %v547 = vpack.c.b16 %v546, %v546
        %548 = vrot.lane.b32.xlu0 %v547, 16
        %v549 = vpop.permute.xlu0 %548
        %v551 = vunpack.c.l.b16 %v464
        %v552 = vpack.c.b16 %v551, %v551
        %553 = vrot.lane.b32.xlu0 %v552, 32
        %v554 = vpop.permute.xlu0 %553
        %v556 = vunpack.c.l.b16 %v490
        %v557 = vpack.c.b16 %v556, %v556
        %558 = vrot.lane.b32.xlu0 %v557, 48
        %v559 = vpop.permute.xlu0 %558
        %v561 = vunpack.c.l.b16 %v462
        %v562 = vpack.c.b16 %v561, %v561
        %563 = vrot.lane.b32.xlu0 %v562, 64
        %v564 = vpop.permute.xlu0 %563
        %v566 = vunpack.c.l.b16 %v488
        %v567 = vpack.c.b16 %v566, %v566
        %568 = vrot.lane.b32.xlu0 %v567, 80
        %v569 = vpop.permute.xlu0 %568
        %v571 = vunpack.c.l.b16 %v466
        %v572 = vpack.c.b16 %v571, %v571
        %573 = vrot.lane.b32.xlu0 %v572, 96
        %v574 = vpop.permute.xlu0 %573
        %v576 = vunpack.c.l.b16 %v492
        %v577 = vpack.c.b16 %v576, %v576
        %578 = vrot.lane.b32.xlu0 %v577, 112
        %v579 = vpop.permute.xlu0 %578
        %v581 = vunpack.c.l.b16 %v536
        %v582 = vpack.c.b16 %v581, %v581
        %583 = vrot.lane.b32.xlu0 %v582, 16
        %v584 = vpop.permute.xlu0 %583
        %v586 = vunpack.c.l.b16 %v516
        %v587 = vpack.c.b16 %v586, %v586
        %588 = vrot.lane.b32.xlu0 %v587, 32
        %v589 = vpop.permute.xlu0 %588
        %v591 = vunpack.c.l.b16 %v542
        %v592 = vpack.c.b16 %v591, %v591
        %593 = vrot.lane.b32.xlu0 %v592, 48
        %v594 = vpop.permute.xlu0 %593
        %v596 = vunpack.c.l.b16 %v514
        %v597 = vpack.c.b16 %v596, %v596
        %598 = vrot.lane.b32.xlu0 %v597, 64
        %v599 = vpop.permute.xlu0 %598
        %v601 = vunpack.c.l.b16 %v540
        %v602 = vpack.c.b16 %v601, %v601
        %603 = vrot.lane.b32.xlu0 %v602, 80
        %v604 = vpop.permute.xlu0 %603
        %v606 = vunpack.c.l.b16 %v518
        %v607 = vpack.c.b16 %v606, %v606
        %608 = vrot.lane.b32.xlu0 %v607, 96
        %v609 = vpop.permute.xlu0 %608
        %v611 = vunpack.c.l.b16 %v544
        %v612 = vpack.c.b16 %v611, %v611
        %613 = vrot.lane.b32.xlu0 %v612, 112
        %v614 = vpop.permute.xlu0 %613
        %vm615 = vcmask 130048
        %v618 = vsel %vm615, %v458, %v549
        %vm619 = vcmask 261120
        %v621 = vsel %vm619, %v618, %v554
        %vm622 = vcmask 392192
        %v624 = vsel %vm622, %v621, %v559
        %vm625 = vcmask 523264
        %v627 = vsel %vm625, %v624, %v564
        %vm628 = vcmask 654336
        %v630 = vsel %vm628, %v627, %v569
        %vm631 = vcmask 785408
        %v633 = vsel %vm631, %v630, %v574
        %vm634 = vcmask 916480
        %v636 = vsel %vm634, %v633, %v579
        %v639 = vsel %vm615, %v510, %v584
        %v641 = vsel %vm619, %v639, %v589
        %v643 = vsel %vm622, %v641, %v594
        %v645 = vsel %vm625, %v643, %v599
        %v647 = vsel %vm628, %v645, %v604
        %v649 = vsel %vm631, %v647, %v609
        %v651 = vsel %vm634, %v649, %v614
        %660 = vrot.lane.b32.xlu0 %v408, 127
        %v661 = vpop.permute.xlu0 %660
        %662 = vrot.lane.b32.xlu0 %v409, 127
        %v663 = vpop.permute.xlu0 %662
        %664 = vrot.lane.b32.xlu0 %v410, 127
        %v665 = vpop.permute.xlu0 %664
        %666 = vrot.lane.b32.xlu0 %v411, 127
        %v667 = vpop.permute.xlu0 %666
        %668 = vrot.lane.b32.xlu0 %v412, 127
        %v669 = vpop.permute.xlu0 %668
        %670 = vrot.lane.b32.xlu0 %v413, 127
        %v671 = vpop.permute.xlu0 %670
        %672 = vrot.lane.b32.xlu0 %v414, 127
        %v673 = vpop.permute.xlu0 %672
        %674 = vrot.lane.b32.xlu0 %v415, 127
        %v675 = vpop.permute.xlu0 %674
        %v678 = vpack.i.b16 %v665, %v661
        %v679 = vshrl.u32 %v661, 16
        %v680 = vshrl.u32 %v665, 16
        %v681 = vpack.i.b16 %v680, %v679
        %v684 = vpack.i.b16 %v673, %v669
        %v685 = vshrl.u32 %v669, 16
        %v686 = vshrl.u32 %v673, 16
        %v687 = vpack.i.b16 %v686, %v685
        %v690 = vpack.i.b16 %v667, %v663
        %v691 = vshrl.u32 %v663, 16
        %v692 = vshrl.u32 %v667, 16
        %v693 = vpack.i.b16 %v692, %v691
        %v696 = vpack.i.b16 %v675, %v671
        %v697 = vshrl.u32 %v671, 16
        %v698 = vshrl.u32 %v675, 16
        %v699 = vpack.i.b16 %v698, %v697
        %v702 = vunpack.c.l.s4 1983009808
        %v703 = vunpack.c.0.s8 %v702
        %v704 = vperm.slane %v678, %v703
        %v707 = vunpack.c.l.s4 1983009808
        %v708 = vunpack.c.0.s8 %v707
        %v709 = vperm.slane %v684, %v708
        %v710 = vrot.slane %v709, 4
        %v711 = vsel %vm451, %v710, %v704
        %v712 = vrot.slane %v704, 4
        %v713 = vsel %vm451, %v709, %v712
        %v715 = vunpack.c.l.s4 1934713408
        %v716 = vunpack.c.0.s8 %v715
        %v717 = vperm.slane %v711, %v716
        %v719 = vunpack.c.l.s4 1934713408
        %v720 = vunpack.c.0.s8 %v719
        %v721 = vperm.slane %v713, %v720
        %v722 = vrot.slane %v717, 4
        %v723 = vsel %vm451, 0, %v722
        %v724 = vrot.slane %v721, 4
        %v725 = vsel %vm451, 0, %v724
        %v728 = vunpack.c.l.s4 1983009808
        %v729 = vunpack.c.0.s8 %v728
        %v730 = vperm.slane %v681, %v729
        %v733 = vunpack.c.l.s4 1983009808
        %v734 = vunpack.c.0.s8 %v733
        %v735 = vperm.slane %v687, %v734
        %v736 = vrot.slane %v735, 4
        %v737 = vsel %vm451, %v736, %v730
        %v738 = vrot.slane %v730, 4
        %v739 = vsel %vm451, %v735, %v738
        %v741 = vunpack.c.l.s4 1934713408
        %v742 = vunpack.c.0.s8 %v741
        %v743 = vperm.slane %v737, %v742
        %v745 = vunpack.c.l.s4 1934713408
        %v746 = vunpack.c.0.s8 %v745
        %v747 = vperm.slane %v739, %v746
        %v748 = vrot.slane %v743, 4
        %v749 = vsel %vm451, 0, %v748
        %v750 = vrot.slane %v747, 4
        %v751 = vsel %vm451, 0, %v750
        %v754 = vunpack.c.l.s4 1983009808
        %v755 = vunpack.c.0.s8 %v754
        %v756 = vperm.slane %v690, %v755
        %v759 = vunpack.c.l.s4 1983009808
        %v760 = vunpack.c.0.s8 %v759
        %v761 = vperm.slane %v696, %v760
        %v762 = vrot.slane %v761, 4
        %v763 = vsel %vm451, %v762, %v756
        %v764 = vrot.slane %v756, 4
        %v765 = vsel %vm451, %v761, %v764
        %v767 = vunpack.c.l.s4 1934713408
        %v768 = vunpack.c.0.s8 %v767
        %v769 = vperm.slane %v763, %v768
        %v771 = vunpack.c.l.s4 1934713408
        %v772 = vunpack.c.0.s8 %v771
        %v773 = vperm.slane %v765, %v772
        %v774 = vrot.slane %v769, 4
        %v775 = vsel %vm451, 0, %v774
        %v776 = vrot.slane %v773, 4
        %v777 = vsel %vm451, 0, %v776
        %v780 = vunpack.c.l.s4 1983009808
        %v781 = vunpack.c.0.s8 %v780
        %v782 = vperm.slane %v693, %v781
        %v785 = vunpack.c.l.s4 1983009808
        %v786 = vunpack.c.0.s8 %v785
        %v787 = vperm.slane %v699, %v786
        %v788 = vrot.slane %v787, 4
        %v789 = vsel %vm451, %v788, %v782
        %v790 = vrot.slane %v782, 4
        %v791 = vsel %vm451, %v787, %v790
        %v793 = vunpack.c.l.s4 1934713408
        %v794 = vunpack.c.0.s8 %v793
        %v795 = vperm.slane %v789, %v794
        %v797 = vunpack.c.l.s4 1934713408
        %v798 = vunpack.c.0.s8 %v797
        %v799 = vperm.slane %v791, %v798
        %v800 = vrot.slane %v795, 4
        %v801 = vsel %vm451, 0, %v800
        %v802 = vrot.slane %v799, 4
        %v803 = vsel %vm451, 0, %v802
        %v805 = vunpack.c.l.b16 %v743
        %v806 = vpack.c.b16 %v805, %v805
        %807 = vrot.lane.b32.xlu0 %v806, 16
        %v808 = vpop.permute.xlu0 %807
        %v810 = vunpack.c.l.b16 %v723
        %v811 = vpack.c.b16 %v810, %v810
        %812 = vrot.lane.b32.xlu0 %v811, 32
        %v813 = vpop.permute.xlu0 %812
        %v815 = vunpack.c.l.b16 %v749
        %v816 = vpack.c.b16 %v815, %v815
        %817 = vrot.lane.b32.xlu0 %v816, 48
        %v818 = vpop.permute.xlu0 %817
        %v820 = vunpack.c.l.b16 %v721
        %v821 = vpack.c.b16 %v820, %v820
        %822 = vrot.lane.b32.xlu0 %v821, 64
        %v823 = vpop.permute.xlu0 %822
        %v825 = vunpack.c.l.b16 %v747
        %v826 = vpack.c.b16 %v825, %v825
        %827 = vrot.lane.b32.xlu0 %v826, 80
        %v828 = vpop.permute.xlu0 %827
        %v830 = vunpack.c.l.b16 %v725
        %v831 = vpack.c.b16 %v830, %v830
        %832 = vrot.lane.b32.xlu0 %v831, 96
        %v833 = vpop.permute.xlu0 %832
        %v835 = vunpack.c.l.b16 %v751
        %v836 = vpack.c.b16 %v835, %v835
        %837 = vrot.lane.b32.xlu0 %v836, 112
        %v838 = vpop.permute.xlu0 %837
        %v840 = vunpack.c.l.b16 %v795
        %v841 = vpack.c.b16 %v840, %v840
        %842 = vrot.lane.b32.xlu0 %v841, 16
        %v843 = vpop.permute.xlu0 %842
        %v845 = vunpack.c.l.b16 %v775
        %v846 = vpack.c.b16 %v845, %v845
        %847 = vrot.lane.b32.xlu0 %v846, 32
        %v848 = vpop.permute.xlu0 %847
        %v850 = vunpack.c.l.b16 %v801
        %v851 = vpack.c.b16 %v850, %v850
        %852 = vrot.lane.b32.xlu0 %v851, 48
        %v853 = vpop.permute.xlu0 %852
        %v855 = vunpack.c.l.b16 %v773
        %v856 = vpack.c.b16 %v855, %v855
        %857 = vrot.lane.b32.xlu0 %v856, 64
        %v858 = vpop.permute.xlu0 %857
        %v860 = vunpack.c.l.b16 %v799
        %v861 = vpack.c.b16 %v860, %v860
        %862 = vrot.lane.b32.xlu0 %v861, 80
        %v863 = vpop.permute.xlu0 %862
        %v865 = vunpack.c.l.b16 %v777
        %v866 = vpack.c.b16 %v865, %v865
        %867 = vrot.lane.b32.xlu0 %v866, 96
        %v868 = vpop.permute.xlu0 %867
        %v870 = vunpack.c.l.b16 %v803
        %v871 = vpack.c.b16 %v870, %v870
        %872 = vrot.lane.b32.xlu0 %v871, 112
        %v873 = vpop.permute.xlu0 %872
        %v876 = vsel %vm615, %v717, %v808
        %v878 = vsel %vm619, %v876, %v813
        %v880 = vsel %vm622, %v878, %v818
        %v882 = vsel %vm625, %v880, %v823
        %v884 = vsel %vm628, %v882, %v828
        %v886 = vsel %vm631, %v884, %v833
        %v888 = vsel %vm634, %v886, %v838
        %v891 = vsel %vm615, %v769, %v843
        %v893 = vsel %vm619, %v891, %v848
        %v895 = vsel %vm622, %v893, %v853
        %v897 = vsel %vm625, %v895, %v858
        %v899 = vsel %vm628, %v897, %v863
        %v901 = vsel %vm631, %v899, %v868
        %v903 = vsel %vm634, %v901, %v873
        %v906 = vunpack.c.l.b16 %v404
        %v907 = vunpack.c.l.b16 %v405
        %v908 = vpack.c.b16 %v907, %v906
        %909 = vrot.lane.b32.xlu0 %v908, 124
        %v910 = vpop.permute.xlu0 %909
        %vm911 = vcmask 31744
        %v913 = vsel %vm911, %v910, 0
        %vm915 = vcmask 1041408
        %v916 = vsel %vm915, %v888, 0
        %v918 = vsel %vm915, %v903, 0
        %920 = vmatpush.bf16.msra.mxu0 0
        %921 = vmatpush.bf16.msra.mxu0 0
        %922 = vmatpush.bf16.msra.mxu0 0
        %923 = vmatpush.bf16.msra.mxu0 0
        %924 = vmatpush.bf16.msra.mxu0 0
        %925 = vmatpush.bf16.msra.mxu0 0
        %926 = vmatpush.bf16.msra.mxu0 0
        %927 = vmatpush.bf16.msra.mxu0 %v916
        %928 = vmatmul.bf16.gmra.mxu0 %v913
        %v929 = vpop.f32.mrf.mxu0
        %v930 = vadd.f32 0.0, %v929
        %v931 = vpop.f32.mrf.mxu0
        %v932 = vadd.f32 0.0, %v931
        %933 = vdwg.mxu0
        %934 = vmatpush.bf16.msra.mxu0 0
        %935 = vmatpush.bf16.msra.mxu0 0
        %936 = vmatpush.bf16.msra.mxu0 0
        %937 = vmatpush.bf16.msra.mxu0 0
        %938 = vmatpush.bf16.msra.mxu0 0
        %939 = vmatpush.bf16.msra.mxu0 0
        %940 = vmatpush.bf16.msra.mxu0 0
        %941 = vmatpush.bf16.msra.mxu0 %v918
        %942 = vmatmul.bf16.gmra.mxu0 %v913
        %v943 = vpop.f32.mrf.mxu0
        %v944 = vadd.f32 0.0, %v943
        %v945 = vpop.f32.mrf.mxu0
        %v946 = vadd.f32 0.0, %v945
        %947 = vdwg.mxu0
        %v949 = vsel %vm911, %v908, 0
        %v951 = vsel %vm915, %v636, 0
        %v953 = vsel %vm915, %v651, 0
        %955 = vmatpush.bf16.msra.mxu0 0
        %956 = vmatpush.bf16.msra.mxu0 0
        %957 = vmatpush.bf16.msra.mxu0 0
        %958 = vmatpush.bf16.msra.mxu0 0
        %959 = vmatpush.bf16.msra.mxu0 0
        %960 = vmatpush.bf16.msra.mxu0 0
        %961 = vmatpush.bf16.msra.mxu0 0
        %962 = vmatpush.bf16.msra.mxu0 %v951
        %963 = vmatmul.bf16.gmra.mxu0 %v949
        %v964 = vpop.f32.mrf.mxu0
        %v965 = vadd.f32 %v930, %v964
        %v966 = vpop.f32.mrf.mxu0
        %v967 = vadd.f32 %v932, %v966
        %968 = vdwg.mxu0
        %969 = vmatpush.bf16.msra.mxu0 0
        %970 = vmatpush.bf16.msra.mxu0 0
        %971 = vmatpush.bf16.msra.mxu0 0
        %972 = vmatpush.bf16.msra.mxu0 0
        %973 = vmatpush.bf16.msra.mxu0 0
        %974 = vmatpush.bf16.msra.mxu0 0
        %975 = vmatpush.bf16.msra.mxu0 0
        %976 = vmatpush.bf16.msra.mxu0 %v953
        %977 = vmatmul.bf16.gmra.mxu0 %v949
        %v978 = vpop.f32.mrf.mxu0
        %v979 = vadd.f32 %v944, %v978
        %v980 = vpop.f32.mrf.mxu0
        %v981 = vadd.f32 %v946, %v980
        %982 = vdwg.mxu0
        %v983 = vld [vmem:[#allocation2] sm:$0xf]
        %v984 = vld [vmem:[#allocation2 + $0x4] sm:$0xf]
        %v985 = vld [vmem:[#allocation2 + $0xc] sm:$0xf]
        %v986 = vld [vmem:[#allocation2 + $0x10] sm:$0xf]
        %v987 = vld [vmem:[#allocation2 + $0x18] sm:$0xf]
        %v988 = vld [vmem:[#allocation2 + $0x1c] sm:$0xf]
        %v989 = vld [vmem:[#allocation2 + $0x24] sm:$0xf]
        %v990 = vld [vmem:[#allocation2 + $0x28] sm:$0xf]
        %999 = vrot.lane.b32.xlu0 %v983, 126
        %v1000 = vpop.permute.xlu0 %999
        %1001 = vrot.lane.b32.xlu0 %v984, 126
        %v1002 = vpop.permute.xlu0 %1001
        %1003 = vrot.lane.b32.xlu0 %v985, 126
        %v1004 = vpop.permute.xlu0 %1003
        %1005 = vrot.lane.b32.xlu0 %v986, 126
        %v1006 = vpop.permute.xlu0 %1005
        %1007 = vrot.lane.b32.xlu0 %v987, 126
        %v1008 = vpop.permute.xlu0 %1007
        %1009 = vrot.lane.b32.xlu0 %v988, 126
        %v1010 = vpop.permute.xlu0 %1009
        %1011 = vrot.lane.b32.xlu0 %v989, 126
        %v1012 = vpop.permute.xlu0 %1011
        %1013 = vrot.lane.b32.xlu0 %v990, 126
        %v1014 = vpop.permute.xlu0 %1013
        %v1017 = vpack.i.b16 %v1004, %v1000
        %v1018 = vshrl.u32 %v1000, 16
        %v1019 = vshrl.u32 %v1004, 16
        %v1020 = vpack.i.b16 %v1019, %v1018
        %v1023 = vpack.i.b16 %v1012, %v1008
        %v1024 = vshrl.u32 %v1008, 16
        %v1025 = vshrl.u32 %v1012, 16
        %v1026 = vpack.i.b16 %v1025, %v1024
        %v1029 = vpack.i.b16 %v1006, %v1002
        %v1030 = vshrl.u32 %v1002, 16
        %v1031 = vshrl.u32 %v1006, 16
        %v1032 = vpack.i.b16 %v1031, %v1030
        %v1035 = vpack.i.b16 %v1014, %v1010
        %v1036 = vshrl.u32 %v1010, 16
        %v1037 = vshrl.u32 %v1014, 16
        %v1038 = vpack.i.b16 %v1037, %v1036
        %v1041 = vunpack.c.l.s4 1983009808
        %v1042 = vunpack.c.0.s8 %v1041
        %v1043 = vperm.slane %v1017, %v1042
        %v1046 = vunpack.c.l.s4 1983009808
        %v1047 = vunpack.c.0.s8 %v1046
        %v1048 = vperm.slane %v1023, %v1047
        %v1049 = vrot.slane %v1048, 4
        %v1050 = vsel %vm451, %v1049, %v1043
        %v1051 = vrot.slane %v1043, 4
        %v1052 = vsel %vm451, %v1048, %v1051
        %v1054 = vunpack.c.l.s4 1934713408
        %v1055 = vunpack.c.0.s8 %v1054
        %v1056 = vperm.slane %v1050, %v1055
        %v1058 = vunpack.c.l.s4 1934713408
        %v1059 = vunpack.c.0.s8 %v1058
        %v1060 = vperm.slane %v1052, %v1059
        %v1061 = vrot.slane %v1056, 4
        %v1062 = vsel %vm451, 0, %v1061
        %v1063 = vrot.slane %v1060, 4
        %v1064 = vsel %vm451, 0, %v1063
        %v1067 = vunpack.c.l.s4 1983009808
        %v1068 = vunpack.c.0.s8 %v1067
        %v1069 = vperm.slane %v1020, %v1068
        %v1072 = vunpack.c.l.s4 1983009808
        %v1073 = vunpack.c.0.s8 %v1072
        %v1074 = vperm.slane %v1026, %v1073
        %v1075 = vrot.slane %v1074, 4
        %v1076 = vsel %vm451, %v1075, %v1069
        %v1077 = vrot.slane %v1069, 4
        %v1078 = vsel %vm451, %v1074, %v1077
        %v1080 = vunpack.c.l.s4 1934713408
        %v1081 = vunpack.c.0.s8 %v1080
        %v1082 = vperm.slane %v1076, %v1081
        %v1084 = vunpack.c.l.s4 1934713408
        %v1085 = vunpack.c.0.s8 %v1084
        %v1086 = vperm.slane %v1078, %v1085
        %v1087 = vrot.slane %v1082, 4
        %v1088 = vsel %vm451, 0, %v1087
        %v1089 = vrot.slane %v1086, 4
        %v1090 = vsel %vm451, 0, %v1089
        %v1093 = vunpack.c.l.s4 1983009808
        %v1094 = vunpack.c.0.s8 %v1093
        %v1095 = vperm.slane %v1029, %v1094
        %v1098 = vunpack.c.l.s4 1983009808
        %v1099 = vunpack.c.0.s8 %v1098
        %v1100 = vperm.slane %v1035, %v1099
        %v1101 = vrot.slane %v1100, 4
        %v1102 = vsel %vm451, %v1101, %v1095
        %v1103 = vrot.slane %v1095, 4
        %v1104 = vsel %vm451, %v1100, %v1103
        %v1106 = vunpack.c.l.s4 1934713408
        %v1107 = vunpack.c.0.s8 %v1106
        %v1108 = vperm.slane %v1102, %v1107
        %v1110 = vunpack.c.l.s4 1934713408
        %v1111 = vunpack.c.0.s8 %v1110
        %v1112 = vperm.slane %v1104, %v1111
        %v1113 = vrot.slane %v1108, 4
        %v1114 = vsel %vm451, 0, %v1113
        %v1115 = vrot.slane %v1112, 4
        %v1116 = vsel %vm451, 0, %v1115
        %v1119 = vunpack.c.l.s4 1983009808
        %v1120 = vunpack.c.0.s8 %v1119
        %v1121 = vperm.slane %v1032, %v1120
        %v1124 = vunpack.c.l.s4 1983009808
        %v1125 = vunpack.c.0.s8 %v1124
        %v1126 = vperm.slane %v1038, %v1125
        %v1127 = vrot.slane %v1126, 4
        %v1128 = vsel %vm451, %v1127, %v1121
        %v1129 = vrot.slane %v1121, 4
        %v1130 = vsel %vm451, %v1126, %v1129
        %v1132 = vunpack.c.l.s4 1934713408
        %v1133 = vunpack.c.0.s8 %v1132
        %v1134 = vperm.slane %v1128, %v1133
        %v1136 = vunpack.c.l.s4 1934713408
        %v1137 = vunpack.c.0.s8 %v1136
        %v1138 = vperm.slane %v1130, %v1137
        %v1139 = vrot.slane %v1134, 4
        %v1140 = vsel %vm451, 0, %v1139
        %v1141 = vrot.slane %v1138, 4
        %v1142 = vsel %vm451, 0, %v1141
        %v1144 = vunpack.c.l.b16 %v1082
        %v1145 = vpack.c.b16 %v1144, %v1144
        %1146 = vrot.lane.b32.xlu0 %v1145, 16
        %v1147 = vpop.permute.xlu0 %1146
        %v1149 = vunpack.c.l.b16 %v1062
        %v1150 = vpack.c.b16 %v1149, %v1149
        %1151 = vrot.lane.b32.xlu0 %v1150, 32
        %v1152 = vpop.permute.xlu0 %1151
        %v1154 = vunpack.c.l.b16 %v1088
        %v1155 = vpack.c.b16 %v1154, %v1154
        %1156 = vrot.lane.b32.xlu0 %v1155, 48
        %v1157 = vpop.permute.xlu0 %1156
        %v1159 = vunpack.c.l.b16 %v1060
        %v1160 = vpack.c.b16 %v1159, %v1159
        %1161 = vrot.lane.b32.xlu0 %v1160, 64
        %v1162 = vpop.permute.xlu0 %1161
        %v1164 = vunpack.c.l.b16 %v1086
        %v1165 = vpack.c.b16 %v1164, %v1164
        %1166 = vrot.lane.b32.xlu0 %v1165, 80
        %v1167 = vpop.permute.xlu0 %1166
        %v1169 = vunpack.c.l.b16 %v1064
        %v1170 = vpack.c.b16 %v1169, %v1169
        %1171 = vrot.lane.b32.xlu0 %v1170, 96
        %v1172 = vpop.permute.xlu0 %1171
        %v1174 = vunpack.c.l.b16 %v1090
        %v1175 = vpack.c.b16 %v1174, %v1174
        %1176 = vrot.lane.b32.xlu0 %v1175, 112
        %v1177 = vpop.permute.xlu0 %1176
        %v1179 = vunpack.c.l.b16 %v1134
        %v1180 = vpack.c.b16 %v1179, %v1179
        %1181 = vrot.lane.b32.xlu0 %v1180, 16
        %v1182 = vpop.permute.xlu0 %1181
        %v1184 = vunpack.c.l.b16 %v1114
        %v1185 = vpack.c.b16 %v1184, %v1184
        %1186 = vrot.lane.b32.xlu0 %v1185, 32
        %v1187 = vpop.permute.xlu0 %1186
        %v1189 = vunpack.c.l.b16 %v1140
        %v1190 = vpack.c.b16 %v1189, %v1189
        %1191 = vrot.lane.b32.xlu0 %v1190, 48
        %v1192 = vpop.permute.xlu0 %1191
        %v1194 = vunpack.c.l.b16 %v1112
        %v1195 = vpack.c.b16 %v1194, %v1194
        %1196 = vrot.lane.b32.xlu0 %v1195, 64
        %v1197 = vpop.permute.xlu0 %1196
        %v1199 = vunpack.c.l.b16 %v1138
        %v1200 = vpack.c.b16 %v1199, %v1199
        %1201 = vrot.lane.b32.xlu0 %v1200, 80
        %v1202 = vpop.permute.xlu0 %1201
        %v1204 = vunpack.c.l.b16 %v1116
        %v1205 = vpack.c.b16 %v1204, %v1204
        %1206 = vrot.lane.b32.xlu0 %v1205, 96
        %v1207 = vpop.permute.xlu0 %1206
        %v1209 = vunpack.c.l.b16 %v1142
        %v1210 = vpack.c.b16 %v1209, %v1209
        %1211 = vrot.lane.b32.xlu0 %v1210, 112
        %v1212 = vpop.permute.xlu0 %1211
        %v1215 = vsel %vm615, %v1056, %v1147
        %v1217 = vsel %vm619, %v1215, %v1152
        %v1219 = vsel %vm622, %v1217, %v1157
        %v1221 = vsel %vm625, %v1219, %v1162
        %v1223 = vsel %vm628, %v1221, %v1167
        %v1225 = vsel %vm631, %v1223, %v1172
        %v1227 = vsel %vm634, %v1225, %v1177
        %v1230 = vsel %vm615, %v1108, %v1182
        %v1232 = vsel %vm619, %v1230, %v1187
        %v1234 = vsel %vm622, %v1232, %v1192
        %v1236 = vsel %vm625, %v1234, %v1197
        %v1238 = vsel %vm628, %v1236, %v1202
        %v1240 = vsel %vm631, %v1238, %v1207
        %v1242 = vsel %vm634, %v1240, %v1212
        %1243 = vrot.lane.b32.xlu0 %v908, 120
        %v1244 = vpop.permute.xlu0 %1243
        %v1246 = vsel %vm911, %v1244, 0
        %v1248 = vsel %vm915, %v1227, 0
        %v1250 = vsel %vm915, %v1242, 0
        %1252 = vmatpush.bf16.msra.mxu0 0
        %1253 = vmatpush.bf16.msra.mxu0 0
        %1254 = vmatpush.bf16.msra.mxu0 0
        %1255 = vmatpush.bf16.msra.mxu0 0
        %1256 = vmatpush.bf16.msra.mxu0 0
        %1257 = vmatpush.bf16.msra.mxu0 0
        %1258 = vmatpush.bf16.msra.mxu0 0
        %1259 = vmatpush.bf16.msra.mxu0 %v1248
        %1260 = vmatmul.bf16.gmra.mxu0 %v1246
        %v1261 = vpop.f32.mrf.mxu0
        %v1262 = vadd.f32 0.0, %v1261
        %v1263 = vpop.f32.mrf.mxu0
        %v1264 = vadd.f32 0.0, %v1263
        %1265 = vdwg.mxu0
        %1266 = vmatpush.bf16.msra.mxu0 0
        %1267 = vmatpush.bf16.msra.mxu0 0
        %1268 = vmatpush.bf16.msra.mxu0 0
        %1269 = vmatpush.bf16.msra.mxu0 0
        %1270 = vmatpush.bf16.msra.mxu0 0
        %1271 = vmatpush.bf16.msra.mxu0 0
        %1272 = vmatpush.bf16.msra.mxu0 0
        %1273 = vmatpush.bf16.msra.mxu0 %v1250
        %1274 = vmatmul.bf16.gmra.mxu0 %v1246
        %v1275 = vpop.f32.mrf.mxu0
        %v1276 = vadd.f32 0.0, %v1275
        %v1277 = vpop.f32.mrf.mxu0
        %v1278 = vadd.f32 0.0, %v1277
        %1279 = vdwg.mxu0
        %v1280 = vadd.f32 %v965, %v1262
        %v1281 = vadd.f32 %v979, %v1276
        %v1282 = vadd.f32 %v967, %v1264
        %v1283 = vadd.f32 %v981, %v1278
        %v1284 = vld [vmem:[#allocation2] sm:$0xf]
        %v1285 = vld [vmem:[#allocation2 + $0x4] sm:$0xf]
        %v1286 = vld [vmem:[#allocation2 + $0x8] sm:$0x1]
        %v1287 = vld [vmem:[#allocation2 + $0xc] sm:$0xf]
        %v1288 = vld [vmem:[#allocation2 + $0x10] sm:$0xf]
        %v1289 = vld [vmem:[#allocation2 + $0x14] sm:$0x1]
        %v1290 = vld [vmem:[#allocation2 + $0x18] sm:$0xf]
        %v1291 = vld [vmem:[#allocation2 + $0x1c] sm:$0xf]
        %v1292 = vld [vmem:[#allocation2 + $0x20] sm:$0x1]
        %v1293 = vld [vmem:[#allocation2 + $0x24] sm:$0xf]
        %v1294 = vld [vmem:[#allocation2 + $0x28] sm:$0xf]
        %v1295 = vld [vmem:[#allocation2 + $0x2c] sm:$0x1]
        %vm1296 = vsmask.f32 3328
        %vm1297 = vsmask.f32 7440
        %vm1298 = vmor %vm1296, %vm1297
        %v1300 = vshrl.u32 %v1284, 16
        %v1302 = vrot.slane %v1300, 4
        %v1303 = vshll.u32 %v1284, 16
        %v1305 = vrot.slane %v1303, 5
        %v1306 = vor.u32 %v1302, %v1305
        %v1307 = vrot.slane %v1306, 4
        %v1309 = vshll.u32 %v1285, 16
        %v1311 = vrot.slane %v1309, 5
        %v1312 = vsel %vm1298, %v1307, %v1311
        %v1313 = vshrl.u32 %v1285, 16
        %v1315 = vrot.slane %v1313, 4
        %v1316 = vor.u32 %v1315, %v1311
        %v1317 = vrot.slane %v1316, 4
        %v1319 = vshll.u32 %v1286, 16
        %v1321 = vrot.slane %v1319, 5
        %v1322 = vsel %vm1298, %v1317, %v1321
        %v1324 = vshrl.u32 %v1287, 16
        %v1326 = vrot.slane %v1324, 4
        %v1327 = vshll.u32 %v1287, 16
        %v1329 = vrot.slane %v1327, 5
        %v1330 = vor.u32 %v1326, %v1329
        %v1331 = vrot.slane %v1330, 4
        %v1333 = vshll.u32 %v1288, 16
        %v1335 = vrot.slane %v1333, 5
        %v1336 = vsel %vm1298, %v1331, %v1335
        %v1337 = vshrl.u32 %v1288, 16
        %v1339 = vrot.slane %v1337, 4
        %v1340 = vor.u32 %v1339, %v1335
        %v1341 = vrot.slane %v1340, 4
        %v1343 = vshll.u32 %v1289, 16
        %v1345 = vrot.slane %v1343, 5
        %v1346 = vsel %vm1298, %v1341, %v1345
        %v1348 = vshrl.u32 %v1290, 16
        %v1350 = vrot.slane %v1348, 4
        %v1351 = vshll.u32 %v1290, 16
        %v1353 = vrot.slane %v1351, 5
        %v1354 = vor.u32 %v1350, %v1353
        %v1355 = vrot.slane %v1354, 4
        %v1357 = vshll.u32 %v1291, 16
        %v1359 = vrot.slane %v1357, 5
        %v1360 = vsel %vm1298, %v1355, %v1359
        %v1361 = vshrl.u32 %v1291, 16
        %v1363 = vrot.slane %v1361, 4
        %v1364 = vor.u32 %v1363, %v1359
        %v1365 = vrot.slane %v1364, 4
        %v1367 = vshll.u32 %v1292, 16
        %v1369 = vrot.slane %v1367, 5
        %v1370 = vsel %vm1298, %v1365, %v1369
        %v1372 = vshrl.u32 %v1293, 16
        %v1374 = vrot.slane %v1372, 4
        %v1375 = vshll.u32 %v1293, 16
        %v1377 = vrot.slane %v1375, 5
        %v1378 = vor.u32 %v1374, %v1377
        %v1379 = vrot.slane %v1378, 4
        %v1381 = vshll.u32 %v1294, 16
        %v1383 = vrot.slane %v1381, 5
        %v1384 = vsel %vm1298, %v1379, %v1383
        %v1385 = vshrl.u32 %v1294, 16
        %v1387 = vrot.slane %v1385, 4
        %v1388 = vor.u32 %v1387, %v1383
        %v1389 = vrot.slane %v1388, 4
        %v1391 = vshll.u32 %v1295, 16
        %v1393 = vrot.slane %v1391, 5
        %v1394 = vsel %vm1298, %v1389, %v1393
        %v1397 = vpack.i.b16 %v1336, %v1312
        %v1398 = vshrl.u32 %v1312, 16
        %v1399 = vshrl.u32 %v1336, 16
        %v1400 = vpack.i.b16 %v1399, %v1398
        %v1403 = vpack.i.b16 %v1384, %v1360
        %v1404 = vshrl.u32 %v1360, 16
        %v1405 = vshrl.u32 %v1384, 16
        %v1406 = vpack.i.b16 %v1405, %v1404
        %v1409 = vpack.i.b16 %v1346, %v1322
        %v1410 = vshrl.u32 %v1322, 16
        %v1411 = vshrl.u32 %v1346, 16
        %v1412 = vpack.i.b16 %v1411, %v1410
        %v1415 = vpack.i.b16 %v1394, %v1370
        %v1416 = vshrl.u32 %v1370, 16
        %v1417 = vshrl.u32 %v1394, 16
        %v1418 = vpack.i.b16 %v1417, %v1416
        %v1421 = vunpack.c.l.s4 1983009808
        %v1422 = vunpack.c.0.s8 %v1421
        %v1423 = vperm.slane %v1397, %v1422
        %v1426 = vunpack.c.l.s4 1983009808
        %v1427 = vunpack.c.0.s8 %v1426
        %v1428 = vperm.slane %v1403, %v1427
        %v1429 = vrot.slane %v1428, 4
        %v1430 = vsel %vm451, %v1429, %v1423
        %v1431 = vrot.slane %v1423, 4
        %v1432 = vsel %vm451, %v1428, %v1431
        %v1434 = vunpack.c.l.s4 1934713408
        %v1435 = vunpack.c.0.s8 %v1434
        %v1436 = vperm.slane %v1430, %v1435
        %v1438 = vunpack.c.l.s4 1934713408
        %v1439 = vunpack.c.0.s8 %v1438
        %v1440 = vperm.slane %v1432, %v1439
        %v1441 = vrot.slane %v1436, 4
        %v1442 = vsel %vm451, 0, %v1441
        %v1443 = vrot.slane %v1440, 4
        %v1444 = vsel %vm451, 0, %v1443
        %v1447 = vunpack.c.l.s4 1983009808
        %v1448 = vunpack.c.0.s8 %v1447
        %v1449 = vperm.slane %v1400, %v1448
        %v1452 = vunpack.c.l.s4 1983009808
        %v1453 = vunpack.c.0.s8 %v1452
        %v1454 = vperm.slane %v1406, %v1453
        %v1455 = vrot.slane %v1454, 4
        %v1456 = vsel %vm451, %v1455, %v1449
        %v1457 = vrot.slane %v1449, 4
        %v1458 = vsel %vm451, %v1454, %v1457
        %v1460 = vunpack.c.l.s4 1934713408
        %v1461 = vunpack.c.0.s8 %v1460
        %v1462 = vperm.slane %v1456, %v1461
        %v1464 = vunpack.c.l.s4 1934713408
        %v1465 = vunpack.c.0.s8 %v1464
        %v1466 = vperm.slane %v1458, %v1465
        %v1467 = vrot.slane %v1462, 4
        %v1468 = vsel %vm451, 0, %v1467
        %v1469 = vrot.slane %v1466, 4
        %v1470 = vsel %vm451, 0, %v1469
        %v1473 = vunpack.c.l.s4 1983009808
        %v1474 = vunpack.c.0.s8 %v1473
        %v1475 = vperm.slane %v1409, %v1474
        %v1478 = vunpack.c.l.s4 1983009808
        %v1479 = vunpack.c.0.s8 %v1478
        %v1480 = vperm.slane %v1415, %v1479
        %v1481 = vrot.slane %v1480, 4
        %v1482 = vsel %vm451, %v1481, %v1475
        %v1483 = vrot.slane %v1475, 4
        %v1484 = vsel %vm451, %v1480, %v1483
        %v1486 = vunpack.c.l.s4 1934713408
        %v1487 = vunpack.c.0.s8 %v1486
        %v1488 = vperm.slane %v1482, %v1487
        %v1490 = vunpack.c.l.s4 1934713408
        %v1491 = vunpack.c.0.s8 %v1490
        %v1492 = vperm.slane %v1484, %v1491
        %v1493 = vrot.slane %v1488, 4
        %v1494 = vsel %vm451, 0, %v1493
        %v1495 = vrot.slane %v1492, 4
        %v1496 = vsel %vm451, 0, %v1495
        %v1499 = vunpack.c.l.s4 1983009808
        %v1500 = vunpack.c.0.s8 %v1499
        %v1501 = vperm.slane %v1412, %v1500
        %v1504 = vunpack.c.l.s4 1983009808
        %v1505 = vunpack.c.0.s8 %v1504
        %v1506 = vperm.slane %v1418, %v1505
        %v1507 = vrot.slane %v1506, 4
        %v1508 = vsel %vm451, %v1507, %v1501
        %v1509 = vrot.slane %v1501, 4
        %v1510 = vsel %vm451, %v1506, %v1509
        %v1512 = vunpack.c.l.s4 1934713408
        %v1513 = vunpack.c.0.s8 %v1512
        %v1514 = vperm.slane %v1508, %v1513
        %v1516 = vunpack.c.l.s4 1934713408
        %v1517 = vunpack.c.0.s8 %v1516
        %v1518 = vperm.slane %v1510, %v1517
        %v1519 = vrot.slane %v1514, 4
        %v1520 = vsel %vm451, 0, %v1519
        %v1521 = vrot.slane %v1518, 4
        %v1522 = vsel %vm451, 0, %v1521
        %v1524 = vunpack.c.l.b16 %v1462
        %v1525 = vpack.c.b16 %v1524, %v1524
        %1526 = vrot.lane.b32.xlu0 %v1525, 16
        %v1527 = vpop.permute.xlu0 %1526
        %v1529 = vunpack.c.l.b16 %v1442
        %v1530 = vpack.c.b16 %v1529, %v1529
        %1531 = vrot.lane.b32.xlu0 %v1530, 32
        %v1532 = vpop.permute.xlu0 %1531
        %v1534 = vunpack.c.l.b16 %v1468
        %v1535 = vpack.c.b16 %v1534, %v1534
        %1536 = vrot.lane.b32.xlu0 %v1535, 48
        %v1537 = vpop.permute.xlu0 %1536
        %v1539 = vunpack.c.l.b16 %v1440
        %v1540 = vpack.c.b16 %v1539, %v1539
        %1541 = vrot.lane.b32.xlu0 %v1540, 64
        %v1542 = vpop.permute.xlu0 %1541
        %v1544 = vunpack.c.l.b16 %v1466
        %v1545 = vpack.c.b16 %v1544, %v1544
        %1546 = vrot.lane.b32.xlu0 %v1545, 80
        %v1547 = vpop.permute.xlu0 %1546
        %v1549 = vunpack.c.l.b16 %v1444
        %v1550 = vpack.c.b16 %v1549, %v1549
        %1551 = vrot.lane.b32.xlu0 %v1550, 96
        %v1552 = vpop.permute.xlu0 %1551
        %v1554 = vunpack.c.l.b16 %v1470
        %v1555 = vpack.c.b16 %v1554, %v1554
        %1556 = vrot.lane.b32.xlu0 %v1555, 112
        %v1557 = vpop.permute.xlu0 %1556
        %v1559 = vunpack.c.l.b16 %v1514
        %v1560 = vpack.c.b16 %v1559, %v1559
        %1561 = vrot.lane.b32.xlu0 %v1560, 16
        %v1562 = vpop.permute.xlu0 %1561
        %v1564 = vunpack.c.l.b16 %v1494
        %v1565 = vpack.c.b16 %v1564, %v1564
        %1566 = vrot.lane.b32.xlu0 %v1565, 32
        %v1567 = vpop.permute.xlu0 %1566
        %v1569 = vunpack.c.l.b16 %v1520
        %v1570 = vpack.c.b16 %v1569, %v1569
        %1571 = vrot.lane.b32.xlu0 %v1570, 48
        %v1572 = vpop.permute.xlu0 %1571
        %v1574 = vunpack.c.l.b16 %v1492
        %v1575 = vpack.c.b16 %v1574, %v1574
        %1576 = vrot.lane.b32.xlu0 %v1575, 64
        %v1577 = vpop.permute.xlu0 %1576
        %v1579 = vunpack.c.l.b16 %v1518
        %v1580 = vpack.c.b16 %v1579, %v1579
        %1581 = vrot.lane.b32.xlu0 %v1580, 80
        %v1582 = vpop.permute.xlu0 %1581
        %v1584 = vunpack.c.l.b16 %v1496
        %v1585 = vpack.c.b16 %v1584, %v1584
        %1586 = vrot.lane.b32.xlu0 %v1585, 96
        %v1587 = vpop.permute.xlu0 %1586
        %v1589 = vunpack.c.l.b16 %v1522
        %v1590 = vpack.c.b16 %v1589, %v1589
        %1591 = vrot.lane.b32.xlu0 %v1590, 112
        %v1592 = vpop.permute.xlu0 %1591
        %v1595 = vsel %vm615, %v1436, %v1527
        %v1597 = vsel %vm619, %v1595, %v1532
        %v1599 = vsel %vm622, %v1597, %v1537
        %v1601 = vsel %vm625, %v1599, %v1542
        %v1603 = vsel %vm628, %v1601, %v1547
        %v1605 = vsel %vm631, %v1603, %v1552
        %v1607 = vsel %vm634, %v1605, %v1557
        %v1610 = vsel %vm615, %v1488, %v1562
        %v1612 = vsel %vm619, %v1610, %v1567
        %v1614 = vsel %vm622, %v1612, %v1572
        %v1616 = vsel %vm625, %v1614, %v1577
        %v1618 = vsel %vm628, %v1616, %v1582
        %v1620 = vsel %vm631, %v1618, %v1587
        %v1622 = vsel %vm634, %v1620, %v1592
        %1623 = vrot.lane.b32.xlu0 %v908, 116
        %v1624 = vpop.permute.xlu0 %1623
        %v1626 = vsel %vm911, %v1624, 0
        %v1628 = vsel %vm915, %v1607, 0
        %v1630 = vsel %vm915, %v1622, 0
        %1632 = vmatpush.bf16.msra.mxu0 0
        %1633 = vmatpush.bf16.msra.mxu0 0
        %1634 = vmatpush.bf16.msra.mxu0 0
        %1635 = vmatpush.bf16.msra.mxu0 0
        %1636 = vmatpush.bf16.msra.mxu0 0
        %1637 = vmatpush.bf16.msra.mxu0 0
        %1638 = vmatpush.bf16.msra.mxu0 0
        %1639 = vmatpush.bf16.msra.mxu0 %v1628
        %1640 = vmatmul.bf16.gmra.mxu0 %v1626
        %v1641 = vpop.f32.mrf.mxu0
        %v1642 = vadd.f32 0.0, %v1641
        %v1643 = vpop.f32.mrf.mxu0
        %v1644 = vadd.f32 0.0, %v1643
        %1645 = vdwg.mxu0
        %1646 = vmatpush.bf16.msra.mxu0 0
        %1647 = vmatpush.bf16.msra.mxu0 0
        %1648 = vmatpush.bf16.msra.mxu0 0
        %1649 = vmatpush.bf16.msra.mxu0 0
        %1650 = vmatpush.bf16.msra.mxu0 0
        %1651 = vmatpush.bf16.msra.mxu0 0
        %1652 = vmatpush.bf16.msra.mxu0 0
        %1653 = vmatpush.bf16.msra.mxu0 %v1630
        %1654 = vmatmul.bf16.gmra.mxu0 %v1626
        %v1655 = vpop.f32.mrf.mxu0
        %v1656 = vadd.f32 0.0, %v1655
        %v1657 = vpop.f32.mrf.mxu0
        %v1658 = vadd.f32 0.0, %v1657
        %1659 = vdwg.mxu0
        %v1660 = vadd.f32 %v1280, %v1642
        %v1661 = vadd.f32 %v1281, %v1656
        %v1662 = vadd.f32 %v1282, %v1644
        %v1663 = vadd.f32 %v1283, %v1658
        %v1664 = vld [vmem:[#allocation2] sm:$0xf]
        %v1665 = vld [vmem:[#allocation2 + $0x4] sm:$0xf]
        %v1666 = vld [vmem:[#allocation2 + $0x8] sm:$0x1]
        %v1667 = vld [vmem:[#allocation2 + $0xc] sm:$0xf]
        %v1668 = vld [vmem:[#allocation2 + $0x10] sm:$0xf]
        %v1669 = vld [vmem:[#allocation2 + $0x14] sm:$0x1]
        %v1670 = vld [vmem:[#allocation2 + $0x18] sm:$0xf]
        %v1671 = vld [vmem:[#allocation2 + $0x1c] sm:$0xf]
        %v1672 = vld [vmem:[#allocation2 + $0x20] sm:$0x1]
        %v1673 = vld [vmem:[#allocation2 + $0x24] sm:$0xf]
        %v1674 = vld [vmem:[#allocation2 + $0x28] sm:$0xf]
        %v1675 = vld [vmem:[#allocation2 + $0x2c] sm:$0x1]
        %v1677 = vshrl.u32 %v1664, 16
        %v1679 = vrot.slane %v1677, 4
        %v1680 = vshll.u32 %v1664, 16
        %v1682 = vrot.slane %v1680, 5
        %v1683 = vor.u32 %v1679, %v1682
        %v1684 = vrot.slane %v1683, 4
        %v1686 = vshll.u32 %v1665, 16
        %v1688 = vrot.slane %v1686, 5
        %v1689 = vsel %vm1298, %v1684, %v1688
        %v1690 = vshrl.u32 %v1665, 16
        %v1692 = vrot.slane %v1690, 4
        %v1693 = vor.u32 %v1692, %v1688
        %v1694 = vrot.slane %v1693, 4
        %v1696 = vshll.u32 %v1666, 16
        %v1698 = vrot.slane %v1696, 5
        %v1699 = vsel %vm1298, %v1694, %v1698
        %v1701 = vshrl.u32 %v1667, 16
        %v1703 = vrot.slane %v1701, 4
        %v1704 = vshll.u32 %v1667, 16
        %v1706 = vrot.slane %v1704, 5
        %v1707 = vor.u32 %v1703, %v1706
        %v1708 = vrot.slane %v1707, 4
        %v1710 = vshll.u32 %v1668, 16
        %v1712 = vrot.slane %v1710, 5
        %v1713 = vsel %vm1298, %v1708, %v1712
        %v1714 = vshrl.u32 %v1668, 16
        %v1716 = vrot.slane %v1714, 4
        %v1717 = vor.u32 %v1716, %v1712
        %v1718 = vrot.slane %v1717, 4
        %v1720 = vshll.u32 %v1669, 16
        %v1722 = vrot.slane %v1720, 5
        %v1723 = vsel %vm1298, %v1718, %v1722
        %v1725 = vshrl.u32 %v1670, 16
        %v1727 = vrot.slane %v1725, 4
        %v1728 = vshll.u32 %v1670, 16
        %v1730 = vrot.slane %v1728, 5
        %v1731 = vor.u32 %v1727, %v1730
        %v1732 = vrot.slane %v1731, 4
        %v1734 = vshll.u32 %v1671, 16
        %v1736 = vrot.slane %v1734, 5
        %v1737 = vsel %vm1298, %v1732, %v1736
        %v1738 = vshrl.u32 %v1671, 16
        %v1740 = vrot.slane %v1738, 4
        %v1741 = vor.u32 %v1740, %v1736
        %v1742 = vrot.slane %v1741, 4
        %v1744 = vshll.u32 %v1672, 16
        %v1746 = vrot.slane %v1744, 5
        %v1747 = vsel %vm1298, %v1742, %v1746
        %v1749 = vshrl.u32 %v1673, 16
        %v1751 = vrot.slane %v1749, 4
        %v1752 = vshll.u32 %v1673, 16
        %v1754 = vrot.slane %v1752, 5
        %v1755 = vor.u32 %v1751, %v1754
        %v1756 = vrot.slane %v1755, 4
        %v1758 = vshll.u32 %v1674, 16
        %v1760 = vrot.slane %v1758, 5
        %v1761 = vsel %vm1298, %v1756, %v1760
        %v1762 = vshrl.u32 %v1674, 16
        %v1764 = vrot.slane %v1762, 4
        %v1765 = vor.u32 %v1764, %v1760
        %v1766 = vrot.slane %v1765, 4
        %v1768 = vshll.u32 %v1675, 16
        %v1770 = vrot.slane %v1768, 5
        %v1771 = vsel %vm1298, %v1766, %v1770
        %1772 = vrot.lane.b32.xlu0 %v1689, 127
        %v1773 = vpop.permute.xlu0 %1772
        %1774 = vrot.lane.b32.xlu0 %v1699, 127
        %v1775 = vpop.permute.xlu0 %1774
        %1776 = vrot.lane.b32.xlu0 %v1713, 127
        %v1777 = vpop.permute.xlu0 %1776
        %1778 = vrot.lane.b32.xlu0 %v1723, 127
        %v1779 = vpop.permute.xlu0 %1778
        %1780 = vrot.lane.b32.xlu0 %v1737, 127
        %v1781 = vpop.permute.xlu0 %1780
        %1782 = vrot.lane.b32.xlu0 %v1747, 127
        %v1783 = vpop.permute.xlu0 %1782
        %1784 = vrot.lane.b32.xlu0 %v1761, 127
        %v1785 = vpop.permute.xlu0 %1784
        %1786 = vrot.lane.b32.xlu0 %v1771, 127
        %v1787 = vpop.permute.xlu0 %1786
        %v1790 = vpack.i.b16 %v1777, %v1773
        %v1791 = vshrl.u32 %v1773, 16
        %v1792 = vshrl.u32 %v1777, 16
        %v1793 = vpack.i.b16 %v1792, %v1791
        %v1796 = vpack.i.b16 %v1785, %v1781
        %v1797 = vshrl.u32 %v1781, 16
        %v1798 = vshrl.u32 %v1785, 16
        %v1799 = vpack.i.b16 %v1798, %v1797
        %v1802 = vpack.i.b16 %v1779, %v1775
        %v1803 = vshrl.u32 %v1775, 16
        %v1804 = vshrl.u32 %v1779, 16
        %v1805 = vpack.i.b16 %v1804, %v1803
        %v1808 = vpack.i.b16 %v1787, %v1783
        %v1809 = vshrl.u32 %v1783, 16
        %v1810 = vshrl.u32 %v1787, 16
        %v1811 = vpack.i.b16 %v1810, %v1809
        %v1814 = vunpack.c.l.s4 1983009808
        %v1815 = vunpack.c.0.s8 %v1814
        %v1816 = vperm.slane %v1790, %v1815
        %v1819 = vunpack.c.l.s4 1983009808
        %v1820 = vunpack.c.0.s8 %v1819
        %v1821 = vperm.slane %v1796, %v1820
        %v1822 = vrot.slane %v1821, 4
        %v1823 = vsel %vm451, %v1822, %v1816
        %v1824 = vrot.slane %v1816, 4
        %v1825 = vsel %vm451, %v1821, %v1824
        %v1827 = vunpack.c.l.s4 1934713408
        %v1828 = vunpack.c.0.s8 %v1827
        %v1829 = vperm.slane %v1823, %v1828
        %v1831 = vunpack.c.l.s4 1934713408
        %v1832 = vunpack.c.0.s8 %v1831
        %v1833 = vperm.slane %v1825, %v1832
        %v1834 = vrot.slane %v1829, 4
        %v1835 = vsel %vm451, 0, %v1834
        %v1836 = vrot.slane %v1833, 4
        %v1837 = vsel %vm451, 0, %v1836
        %v1840 = vunpack.c.l.s4 1983009808
        %v1841 = vunpack.c.0.s8 %v1840
        %v1842 = vperm.slane %v1793, %v1841
        %v1845 = vunpack.c.l.s4 1983009808
        %v1846 = vunpack.c.0.s8 %v1845
        %v1847 = vperm.slane %v1799, %v1846
        %v1848 = vrot.slane %v1847, 4
        %v1849 = vsel %vm451, %v1848, %v1842
        %v1850 = vrot.slane %v1842, 4
        %v1851 = vsel %vm451, %v1847, %v1850
        %v1853 = vunpack.c.l.s4 1934713408
        %v1854 = vunpack.c.0.s8 %v1853
        %v1855 = vperm.slane %v1849, %v1854
        %v1857 = vunpack.c.l.s4 1934713408
        %v1858 = vunpack.c.0.s8 %v1857
        %v1859 = vperm.slane %v1851, %v1858
        %v1860 = vrot.slane %v1855, 4
        %v1861 = vsel %vm451, 0, %v1860
        %v1862 = vrot.slane %v1859, 4
        %v1863 = vsel %vm451, 0, %v1862
        %v1866 = vunpack.c.l.s4 1983009808
        %v1867 = vunpack.c.0.s8 %v1866
        %v1868 = vperm.slane %v1802, %v1867
        %v1871 = vunpack.c.l.s4 1983009808
        %v1872 = vunpack.c.0.s8 %v1871
        %v1873 = vperm.slane %v1808, %v1872
        %v1874 = vrot.slane %v1873, 4
        %v1875 = vsel %vm451, %v1874, %v1868
        %v1876 = vrot.slane %v1868, 4
        %v1877 = vsel %vm451, %v1873, %v1876
        %v1879 = vunpack.c.l.s4 1934713408
        %v1880 = vunpack.c.0.s8 %v1879
        %v1881 = vperm.slane %v1875, %v1880
        %v1883 = vunpack.c.l.s4 1934713408
        %v1884 = vunpack.c.0.s8 %v1883
        %v1885 = vperm.slane %v1877, %v1884
        %v1886 = vrot.slane %v1881, 4
        %v1887 = vsel %vm451, 0, %v1886
        %v1888 = vrot.slane %v1885, 4
        %v1889 = vsel %vm451, 0, %v1888
        %v1892 = vunpack.c.l.s4 1983009808
        %v1893 = vunpack.c.0.s8 %v1892
        %v1894 = vperm.slane %v1805, %v1893
        %v1897 = vunpack.c.l.s4 1983009808
        %v1898 = vunpack.c.0.s8 %v1897
        %v1899 = vperm.slane %v1811, %v1898
        %v1900 = vrot.slane %v1899, 4
        %v1901 = vsel %vm451, %v1900, %v1894
        %v1902 = vrot.slane %v1894, 4
        %v1903 = vsel %vm451, %v1899, %v1902
        %v1905 = vunpack.c.l.s4 1934713408
        %v1906 = vunpack.c.0.s8 %v1905
        %v1907 = vperm.slane %v1901, %v1906
        %v1909 = vunpack.c.l.s4 1934713408
        %v1910 = vunpack.c.0.s8 %v1909
        %v1911 = vperm.slane %v1903, %v1910
        %v1912 = vrot.slane %v1907, 4
        %v1913 = vsel %vm451, 0, %v1912
        %v1914 = vrot.slane %v1911, 4
        %v1915 = vsel %vm451, 0, %v1914
        %v1917 = vunpack.c.l.b16 %v1855
        %v1918 = vpack.c.b16 %v1917, %v1917
        %1919 = vrot.lane.b32.xlu0 %v1918, 16
        %v1920 = vpop.permute.xlu0 %1919
        %v1922 = vunpack.c.l.b16 %v1835
        %v1923 = vpack.c.b16 %v1922, %v1922
        %1924 = vrot.lane.b32.xlu0 %v1923, 32
        %v1925 = vpop.permute.xlu0 %1924
        %v1927 = vunpack.c.l.b16 %v1861
        %v1928 = vpack.c.b16 %v1927, %v1927
        %1929 = vrot.lane.b32.xlu0 %v1928, 48
        %v1930 = vpop.permute.xlu0 %1929
        %v1932 = vunpack.c.l.b16 %v1833
        %v1933 = vpack.c.b16 %v1932, %v1932
        %1934 = vrot.lane.b32.xlu0 %v1933, 64
        %v1935 = vpop.permute.xlu0 %1934
        %v1937 = vunpack.c.l.b16 %v1859
        %v1938 = vpack.c.b16 %v1937, %v1937
        %1939 = vrot.lane.b32.xlu0 %v1938, 80
        %v1940 = vpop.permute.xlu0 %1939
        %v1942 = vunpack.c.l.b16 %v1837
        %v1943 = vpack.c.b16 %v1942, %v1942
        %1944 = vrot.lane.b32.xlu0 %v1943, 96
        %v1945 = vpop.permute.xlu0 %1944
        %v1947 = vunpack.c.l.b16 %v1863
        %v1948 = vpack.c.b16 %v1947, %v1947
        %1949 = vrot.lane.b32.xlu0 %v1948, 112
        %v1950 = vpop.permute.xlu0 %1949
        %v1952 = vunpack.c.l.b16 %v1907
        %v1953 = vpack.c.b16 %v1952, %v1952
        %1954 = vrot.lane.b32.xlu0 %v1953, 16
        %v1955 = vpop.permute.xlu0 %1954
        %v1957 = vunpack.c.l.b16 %v1887
        %v1958 = vpack.c.b16 %v1957, %v1957
        %1959 = vrot.lane.b32.xlu0 %v1958, 32
        %v1960 = vpop.permute.xlu0 %1959
        %v1962 = vunpack.c.l.b16 %v1913
        %v1963 = vpack.c.b16 %v1962, %v1962
        %1964 = vrot.lane.b32.xlu0 %v1963, 48
        %v1965 = vpop.permute.xlu0 %1964
        %v1967 = vunpack.c.l.b16 %v1885
        %v1968 = vpack.c.b16 %v1967, %v1967
        %1969 = vrot.lane.b32.xlu0 %v1968, 64
        %v1970 = vpop.permute.xlu0 %1969
        %v1972 = vunpack.c.l.b16 %v1911
        %v1973 = vpack.c.b16 %v1972, %v1972
        %1974 = vrot.lane.b32.xlu0 %v1973, 80
        %v1975 = vpop.permute.xlu0 %1974
        %v1977 = vunpack.c.l.b16 %v1889
        %v1978 = vpack.c.b16 %v1977, %v1977
        %1979 = vrot.lane.b32.xlu0 %v1978, 96
        %v1980 = vpop.permute.xlu0 %1979
        %v1982 = vunpack.c.l.b16 %v1915
        %v1983 = vpack.c.b16 %v1982, %v1982
        %1984 = vrot.lane.b32.xlu0 %v1983, 112
        %v1985 = vpop.permute.xlu0 %1984
        %v1988 = vsel %vm615, %v1829, %v1920
        %v1990 = vsel %vm619, %v1988, %v1925
        %v1992 = vsel %vm622, %v1990, %v1930
        %v1994 = vsel %vm625, %v1992, %v1935
        %v1996 = vsel %vm628, %v1994, %v1940
        %v1998 = vsel %vm631, %v1996, %v1945
        %v2000 = vsel %vm634, %v1998, %v1950
        %v2003 = vsel %vm615, %v1881, %v1955
        %v2005 = vsel %vm619, %v2003, %v1960
        %v2007 = vsel %vm622, %v2005, %v1965
        %v2009 = vsel %vm625, %v2007, %v1970
        %v2011 = vsel %vm628, %v2009, %v1975
        %v2013 = vsel %vm631, %v2011, %v1980
        %v2015 = vsel %vm634, %v2013, %v1985
        %2016 = vrot.lane.b32.xlu0 %v908, 112
        %v2017 = vpop.permute.xlu0 %2016
        %v2019 = vsel %vm911, %v2017, 0
        %v2021 = vsel %vm915, %v2000, 0
        %v2023 = vsel %vm915, %v2015, 0
        %2025 = vmatpush.bf16.msra.mxu0 0
        %2026 = vmatpush.bf16.msra.mxu0 0
        %2027 = vmatpush.bf16.msra.mxu0 0
        %2028 = vmatpush.bf16.msra.mxu0 0
        %2029 = vmatpush.bf16.msra.mxu0 0
        %2030 = vmatpush.bf16.msra.mxu0 0
        %2031 = vmatpush.bf16.msra.mxu0 0
        %2032 = vmatpush.bf16.msra.mxu0 %v2021
        %2033 = vmatmul.bf16.gmra.mxu0 %v2019
        %v2034 = vpop.f32.mrf.mxu0
        %v2035 = vadd.f32 0.0, %v2034
        %v2036 = vpop.f32.mrf.mxu0
        %v2037 = vadd.f32 0.0, %v2036
        %2038 = vdwg.mxu0
        %2039 = vmatpush.bf16.msra.mxu0 0
        %2040 = vmatpush.bf16.msra.mxu0 0
        %2041 = vmatpush.bf16.msra.mxu0 0
        %2042 = vmatpush.bf16.msra.mxu0 0
        %2043 = vmatpush.bf16.msra.mxu0 0
        %2044 = vmatpush.bf16.msra.mxu0 0
        %2045 = vmatpush.bf16.msra.mxu0 0
        %2046 = vmatpush.bf16.msra.mxu0 %v2023
        %2047 = vmatmul.bf16.gmra.mxu0 %v2019
        %v2048 = vpop.f32.mrf.mxu0
        %v2049 = vadd.f32 0.0, %v2048
        %v2050 = vpop.f32.mrf.mxu0
        %v2051 = vadd.f32 0.0, %v2050
        %2052 = vdwg.mxu0
        %v2053 = vadd.f32 %v1660, %v2035
        %v2054 = vadd.f32 %v1661, %v2049
        %v2055 = vadd.f32 %v1662, %v2037
        %v2056 = vadd.f32 %v1663, %v2051
        %v2057 = vld [vmem:[#allocation2] sm:$0xf]
        %v2058 = vld [vmem:[#allocation2 + $0x4] sm:$0xf]
        %v2059 = vld [vmem:[#allocation2 + $0x8] sm:$0x1]
        %v2060 = vld [vmem:[#allocation2 + $0xc] sm:$0xf]
        %v2061 = vld [vmem:[#allocation2 + $0x10] sm:$0xf]
        %v2062 = vld [vmem:[#allocation2 + $0x14] sm:$0x1]
        %v2063 = vld [vmem:[#allocation2 + $0x18] sm:$0xf]
        %v2064 = vld [vmem:[#allocation2 + $0x1c] sm:$0xf]
        %v2065 = vld [vmem:[#allocation2 + $0x20] sm:$0x1]
        %v2066 = vld [vmem:[#allocation2 + $0x24] sm:$0xf]
        %v2067 = vld [vmem:[#allocation2 + $0x28] sm:$0xf]
        %v2068 = vld [vmem:[#allocation2 + $0x2c] sm:$0x1]
        %v2070 = vshrl.u32 %v2057, 16
        %v2072 = vrot.slane %v2070, 4
        %v2073 = vshll.u32 %v2057, 16
        %v2075 = vrot.slane %v2073, 5
        %v2076 = vor.u32 %v2072, %v2075
        %v2077 = vrot.slane %v2076, 4
        %v2079 = vshll.u32 %v2058, 16
        %v2081 = vrot.slane %v2079, 5
        %v2082 = vsel %vm1298, %v2077, %v2081
        %v2083 = vshrl.u32 %v2058, 16
        %v2085 = vrot.slane %v2083, 4
        %v2086 = vor.u32 %v2085, %v2081
        %v2087 = vrot.slane %v2086, 4
        %v2089 = vshll.u32 %v2059, 16
        %v2091 = vrot.slane %v2089, 5
        %v2092 = vsel %vm1298, %v2087, %v2091
        %v2094 = vshrl.u32 %v2060, 16
        %v2096 = vrot.slane %v2094, 4
        %v2097 = vshll.u32 %v2060, 16
        %v2099 = vrot.slane %v2097, 5
        %v2100 = vor.u32 %v2096, %v2099
        %v2101 = vrot.slane %v2100, 4
        %v2103 = vshll.u32 %v2061, 16
        %v2105 = vrot.slane %v2103, 5
        %v2106 = vsel %vm1298, %v2101, %v2105
        %v2107 = vshrl.u32 %v2061, 16
        %v2109 = vrot.slane %v2107, 4
        %v2110 = vor.u32 %v2109, %v2105
        %v2111 = vrot.slane %v2110, 4
        %v2113 = vshll.u32 %v2062, 16
        %v2115 = vrot.slane %v2113, 5
        %v2116 = vsel %vm1298, %v2111, %v2115
        %v2118 = vshrl.u32 %v2063, 16
        %v2120 = vrot.slane %v2118, 4
        %v2121 = vshll.u32 %v2063, 16
        %v2123 = vrot.slane %v2121, 5
        %v2124 = vor.u32 %v2120, %v2123
        %v2125 = vrot.slane %v2124, 4
        %v2127 = vshll.u32 %v2064, 16
        %v2129 = vrot.slane %v2127, 5
        %v2130 = vsel %vm1298, %v2125, %v2129
        %v2131 = vshrl.u32 %v2064, 16
        %v2133 = vrot.slane %v2131, 4
        %v2134 = vor.u32 %v2133, %v2129
        %v2135 = vrot.slane %v2134, 4
        %v2137 = vshll.u32 %v2065, 16
        %v2139 = vrot.slane %v2137, 5
        %v2140 = vsel %vm1298, %v2135, %v2139
        %v2142 = vshrl.u32 %v2066, 16
        %v2144 = vrot.slane %v2142, 4
        %v2145 = vshll.u32 %v2066, 16
        %v2147 = vrot.slane %v2145, 5
        %v2148 = vor.u32 %v2144, %v2147
        %v2149 = vrot.slane %v2148, 4
        %v2151 = vshll.u32 %v2067, 16
        %v2153 = vrot.slane %v2151, 5
        %v2154 = vsel %vm1298, %v2149, %v2153
        %v2155 = vshrl.u32 %v2067, 16
        %v2157 = vrot.slane %v2155, 4
        %v2158 = vor.u32 %v2157, %v2153
        %v2159 = vrot.slane %v2158, 4
        %v2161 = vshll.u32 %v2068, 16
        %v2163 = vrot.slane %v2161, 5
        %v2164 = vsel %vm1298, %v2159, %v2163
        %2165 = vrot.lane.b32.xlu0 %v2082, 126
        %v2166 = vpop.permute.xlu0 %2165
        %2167 = vrot.lane.b32.xlu0 %v2092, 126
        %v2168 = vpop.permute.xlu0 %2167
        %2169 = vrot.lane.b32.xlu0 %v2106, 126
        %v2170 = vpop.permute.xlu0 %2169
        %2171 = vrot.lane.b32.xlu0 %v2116, 126
        %v2172 = vpop.permute.xlu0 %2171
        %2173 = vrot.lane.b32.xlu0 %v2130, 126
        %v2174 = vpop.permute.xlu0 %2173
        %2175 = vrot.lane.b32.xlu0 %v2140, 126
        %v2176 = vpop.permute.xlu0 %2175
        %2177 = vrot.lane.b32.xlu0 %v2154, 126
        %v2178 = vpop.permute.xlu0 %2177
        %2179 = vrot.lane.b32.xlu0 %v2164, 126
        %v2180 = vpop.permute.xlu0 %2179
        %v2183 = vpack.i.b16 %v2170, %v2166
        %v2184 = vshrl.u32 %v2166, 16
        %v2185 = vshrl.u32 %v2170, 16
        %v2186 = vpack.i.b16 %v2185, %v2184
        %v2189 = vpack.i.b16 %v2178, %v2174
        %v2190 = vshrl.u32 %v2174, 16
        %v2191 = vshrl.u32 %v2178, 16
        %v2192 = vpack.i.b16 %v2191, %v2190
        %v2195 = vpack.i.b16 %v2172, %v2168
        %v2196 = vshrl.u32 %v2168, 16
        %v2197 = vshrl.u32 %v2172, 16
        %v2198 = vpack.i.b16 %v2197, %v2196
        %v2201 = vpack.i.b16 %v2180, %v2176
        %v2202 = vshrl.u32 %v2176, 16
        %v2203 = vshrl.u32 %v2180, 16
        %v2204 = vpack.i.b16 %v2203, %v2202
        %v2207 = vunpack.c.l.s4 1983009808
        %v2208 = vunpack.c.0.s8 %v2207
        %v2209 = vperm.slane %v2183, %v2208
        %v2212 = vunpack.c.l.s4 1983009808
        %v2213 = vunpack.c.0.s8 %v2212
        %v2214 = vperm.slane %v2189, %v2213
        %v2215 = vrot.slane %v2214, 4
        %v2216 = vsel %vm451, %v2215, %v2209
        %v2217 = vrot.slane %v2209, 4
        %v2218 = vsel %vm451, %v2214, %v2217
        %v2220 = vunpack.c.l.s4 1934713408
        %v2221 = vunpack.c.0.s8 %v2220
        %v2222 = vperm.slane %v2216, %v2221
        %v2224 = vunpack.c.l.s4 1934713408
        %v2225 = vunpack.c.0.s8 %v2224
        %v2226 = vperm.slane %v2218, %v2225
        %v2227 = vrot.slane %v2222, 4
        %v2228 = vsel %vm451, 0, %v2227
        %v2229 = vrot.slane %v2226, 4
        %v2230 = vsel %vm451, 0, %v2229
        %v2233 = vunpack.c.l.s4 1983009808
        %v2234 = vunpack.c.0.s8 %v2233
        %v2235 = vperm.slane %v2186, %v2234
        %v2238 = vunpack.c.l.s4 1983009808
        %v2239 = vunpack.c.0.s8 %v2238
        %v2240 = vperm.slane %v2192, %v2239
        %v2241 = vrot.slane %v2240, 4
        %v2242 = vsel %vm451, %v2241, %v2235
        %v2243 = vrot.slane %v2235, 4
        %v2244 = vsel %vm451, %v2240, %v2243
        %v2246 = vunpack.c.l.s4 1934713408
        %v2247 = vunpack.c.0.s8 %v2246
        %v2248 = vperm.slane %v2242, %v2247
        %v2250 = vunpack.c.l.s4 1934713408
        %v2251 = vunpack.c.0.s8 %v2250
        %v2252 = vperm.slane %v2244, %v2251
        %v2253 = vrot.slane %v2248, 4
        %v2254 = vsel %vm451, 0, %v2253
        %v2255 = vrot.slane %v2252, 4
        %v2256 = vsel %vm451, 0, %v2255
        %v2259 = vunpack.c.l.s4 1983009808
        %v2260 = vunpack.c.0.s8 %v2259
        %v2261 = vperm.slane %v2195, %v2260
        %v2264 = vunpack.c.l.s4 1983009808
        %v2265 = vunpack.c.0.s8 %v2264
        %v2266 = vperm.slane %v2201, %v2265
        %v2267 = vrot.slane %v2266, 4
        %v2268 = vsel %vm451, %v2267, %v2261
        %v2269 = vrot.slane %v2261, 4
        %v2270 = vsel %vm451, %v2266, %v2269
        %v2272 = vunpack.c.l.s4 1934713408
        %v2273 = vunpack.c.0.s8 %v2272
        %v2274 = vperm.slane %v2268, %v2273
        %v2276 = vunpack.c.l.s4 1934713408
        %v2277 = vunpack.c.0.s8 %v2276
        %v2278 = vperm.slane %v2270, %v2277
        %v2279 = vrot.slane %v2274, 4
        %v2280 = vsel %vm451, 0, %v2279
        %v2281 = vrot.slane %v2278, 4
        %v2282 = vsel %vm451, 0, %v2281
        %v2285 = vunpack.c.l.s4 1983009808
        %v2286 = vunpack.c.0.s8 %v2285
        %v2287 = vperm.slane %v2198, %v2286
        %v2290 = vunpack.c.l.s4 1983009808
        %v2291 = vunpack.c.0.s8 %v2290
        %v2292 = vperm.slane %v2204, %v2291
        %v2293 = vrot.slane %v2292, 4
        %v2294 = vsel %vm451, %v2293, %v2287
        %v2295 = vrot.slane %v2287, 4
        %v2296 = vsel %vm451, %v2292, %v2295
        %v2298 = vunpack.c.l.s4 1934713408
        %v2299 = vunpack.c.0.s8 %v2298
        %v2300 = vperm.slane %v2294, %v2299
        %v2302 = vunpack.c.l.s4 1934713408
        %v2303 = vunpack.c.0.s8 %v2302
        %v2304 = vperm.slane %v2296, %v2303
        %v2305 = vrot.slane %v2300, 4
        %v2306 = vsel %vm451, 0, %v2305
        %v2307 = vrot.slane %v2304, 4
        %v2308 = vsel %vm451, 0, %v2307
        %v2310 = vunpack.c.l.b16 %v2248
        %v2311 = vpack.c.b16 %v2310, %v2310
        %2312 = vrot.lane.b32.xlu0 %v2311, 16
        %v2313 = vpop.permute.xlu0 %2312
        %v2315 = vunpack.c.l.b16 %v2228
        %v2316 = vpack.c.b16 %v2315, %v2315
        %2317 = vrot.lane.b32.xlu0 %v2316, 32
        %v2318 = vpop.permute.xlu0 %2317
        %v2320 = vunpack.c.l.b16 %v2254
        %v2321 = vpack.c.b16 %v2320, %v2320
        %2322 = vrot.lane.b32.xlu0 %v2321, 48
        %v2323 = vpop.permute.xlu0 %2322
        %v2325 = vunpack.c.l.b16 %v2226
        %v2326 = vpack.c.b16 %v2325, %v2325
        %2327 = vrot.lane.b32.xlu0 %v2326, 64
        %v2328 = vpop.permute.xlu0 %2327
        %v2330 = vunpack.c.l.b16 %v2252
        %v2331 = vpack.c.b16 %v2330, %v2330
        %2332 = vrot.lane.b32.xlu0 %v2331, 80
        %v2333 = vpop.permute.xlu0 %2332
        %v2335 = vunpack.c.l.b16 %v2230
        %v2336 = vpack.c.b16 %v2335, %v2335
        %2337 = vrot.lane.b32.xlu0 %v2336, 96
        %v2338 = vpop.permute.xlu0 %2337
        %v2340 = vunpack.c.l.b16 %v2256
        %v2341 = vpack.c.b16 %v2340, %v2340
        %2342 = vrot.lane.b32.xlu0 %v2341, 112
        %v2343 = vpop.permute.xlu0 %2342
        %v2345 = vunpack.c.l.b16 %v2300
        %v2346 = vpack.c.b16 %v2345, %v2345
        %2347 = vrot.lane.b32.xlu0 %v2346, 16
        %v2348 = vpop.permute.xlu0 %2347
        %v2350 = vunpack.c.l.b16 %v2280
        %v2351 = vpack.c.b16 %v2350, %v2350
        %2352 = vrot.lane.b32.xlu0 %v2351, 32
        %v2353 = vpop.permute.xlu0 %2352
        %v2355 = vunpack.c.l.b16 %v2306
        %v2356 = vpack.c.b16 %v2355, %v2355
        %2357 = vrot.lane.b32.xlu0 %v2356, 48
        %v2358 = vpop.permute.xlu0 %2357
        %v2360 = vunpack.c.l.b16 %v2278
        %v2361 = vpack.c.b16 %v2360, %v2360
        %2362 = vrot.lane.b32.xlu0 %v2361, 64
        %v2363 = vpop.permute.xlu0 %2362
        %v2365 = vunpack.c.l.b16 %v2304
        %v2366 = vpack.c.b16 %v2365, %v2365
        %2367 = vrot.lane.b32.xlu0 %v2366, 80
        %v2368 = vpop.permute.xlu0 %2367
        %v2370 = vunpack.c.l.b16 %v2282
        %v2371 = vpack.c.b16 %v2370, %v2370
        %2372 = vrot.lane.b32.xlu0 %v2371, 96
        %v2373 = vpop.permute.xlu0 %2372
        %v2375 = vunpack.c.l.b16 %v2308
        %v2376 = vpack.c.b16 %v2375, %v2375
        %2377 = vrot.lane.b32.xlu0 %v2376, 112
        %v2378 = vpop.permute.xlu0 %2377
        %v2381 = vsel %vm615, %v2222, %v2313
        %v2383 = vsel %vm619, %v2381, %v2318
        %v2385 = vsel %vm622, %v2383, %v2323
        %v2387 = vsel %vm625, %v2385, %v2328
        %v2389 = vsel %vm628, %v2387, %v2333
        %v2391 = vsel %vm631, %v2389, %v2338
        %v2393 = vsel %vm634, %v2391, %v2343
        %v2396 = vsel %vm615, %v2274, %v2348
        %v2398 = vsel %vm619, %v2396, %v2353
        %v2400 = vsel %vm622, %v2398, %v2358
        %v2402 = vsel %vm625, %v2400, %v2363
        %v2404 = vsel %vm628, %v2402, %v2368
        %v2406 = vsel %vm631, %v2404, %v2373
        %v2408 = vsel %vm634, %v2406, %v2378
        %2409 = vrot.lane.b32.xlu0 %v908, 108
        %v2410 = vpop.permute.xlu0 %2409
        %v2412 = vsel %vm911, %v2410, 0
        %v2414 = vsel %vm915, %v2393, 0
        %v2416 = vsel %vm915, %v2408, 0
        %2418 = vmatpush.bf16.msra.mxu0 0
        %2419 = vmatpush.bf16.msra.mxu0 0
        %2420 = vmatpush.bf16.msra.mxu0 0
        %2421 = vmatpush.bf16.msra.mxu0 0
        %2422 = vmatpush.bf16.msra.mxu0 0
        %2423 = vmatpush.bf16.msra.mxu0 0
        %2424 = vmatpush.bf16.msra.mxu0 0
        %2425 = vmatpush.bf16.msra.mxu0 %v2414
        %2426 = vmatmul.bf16.gmra.mxu0 %v2412
        %v2427 = vpop.f32.mrf.mxu0
        %v2428 = vadd.f32 0.0, %v2427
        %v2429 = vpop.f32.mrf.mxu0
        %v2430 = vadd.f32 0.0, %v2429
        %2431 = vdwg.mxu0
        %2432 = vmatpush.bf16.msra.mxu0 0
        %2433 = vmatpush.bf16.msra.mxu0 0
        %2434 = vmatpush.bf16.msra.mxu0 0
        %2435 = vmatpush.bf16.msra.mxu0 0
        %2436 = vmatpush.bf16.msra.mxu0 0
        %2437 = vmatpush.bf16.msra.mxu0 0
        %2438 = vmatpush.bf16.msra.mxu0 0
        %2439 = vmatpush.bf16.msra.mxu0 %v2416
        %2440 = vmatmul.bf16.gmra.mxu0 %v2412
        %v2441 = vpop.f32.mrf.mxu0
        %v2442 = vadd.f32 0.0, %v2441
        %v2443 = vpop.f32.mrf.mxu0
        %v2444 = vadd.f32 0.0, %v2443
        %2445 = vdwg.mxu0
        %v2446 = vadd.f32 %v2053, %v2428
        %v2447 = vadd.f32 %v2054, %v2442
        %v2448 = vadd.f32 %v2055, %v2430
        %v2449 = vadd.f32 %v2056, %v2444
        %v2450 = vld [vmem:[#allocation2] sm:$0xe]
        %v2451 = vld [vmem:[#allocation2 + $0x4] sm:$0xf]
        %v2452 = vld [vmem:[#allocation2 + $0x8] sm:$0x1]
        %v2453 = vld [vmem:[#allocation2 + $0xc] sm:$0xe]
        %v2454 = vld [vmem:[#allocation2 + $0x10] sm:$0xf]
        %v2455 = vld [vmem:[#allocation2 + $0x14] sm:$0x1]
        %v2456 = vld [vmem:[#allocation2 + $0x18] sm:$0xe]
        %v2457 = vld [vmem:[#allocation2 + $0x1c] sm:$0xf]
        %v2458 = vld [vmem:[#allocation2 + $0x20] sm:$0x1]
        %v2459 = vld [vmem:[#allocation2 + $0x24] sm:$0xe]
        %v2460 = vld [vmem:[#allocation2 + $0x28] sm:$0xf]
        %v2461 = vld [vmem:[#allocation2 + $0x2c] sm:$0x1]
        %vm2474 = vcmask 1042432
        %vm2475 = vcmask 1046532
        %vm2476 = vmor %vm2474, %vm2475
        %v2477 = vrot.slane %v2450, 5
        %v2478 = vrot.slane %v2477, 4
        %v2479 = vrot.slane %v2451, 5
        %v2480 = vsel %vm2476, %v2478, %v2479
        %v2481 = vrot.slane %v2479, 4
        %v2482 = vrot.slane %v2452, 5
        %v2483 = vsel %vm2476, %v2481, %v2482
        %v2484 = vrot.slane %v2453, 5
        %v2485 = vrot.slane %v2484, 4
        %v2486 = vrot.slane %v2454, 5
        %v2487 = vsel %vm2476, %v2485, %v2486
        %v2488 = vrot.slane %v2486, 4
        %v2489 = vrot.slane %v2455, 5
        %v2490 = vsel %vm2476, %v2488, %v2489
        %v2491 = vrot.slane %v2456, 5
        %v2492 = vrot.slane %v2491, 4
        %v2493 = vrot.slane %v2457, 5
        %v2494 = vsel %vm2476, %v2492, %v2493
        %v2495 = vrot.slane %v2493, 4
        %v2496 = vrot.slane %v2458, 5
        %v2497 = vsel %vm2476, %v2495, %v2496
        %v2498 = vrot.slane %v2459, 5
        %v2499 = vrot.slane %v2498, 4
        %v2500 = vrot.slane %v2460, 5
        %v2501 = vsel %vm2476, %v2499, %v2500
        %v2502 = vrot.slane %v2500, 4
        %v2503 = vrot.slane %v2461, 5
        %v2504 = vsel %vm2476, %v2502, %v2503
        %v2507 = vpack.i.b16 %v2487, %v2480
        %v2508 = vshrl.u32 %v2480, 16
        %v2509 = vshrl.u32 %v2487, 16
        %v2510 = vpack.i.b16 %v2509, %v2508
        %v2513 = vpack.i.b16 %v2501, %v2494
        %v2514 = vshrl.u32 %v2494, 16
        %v2515 = vshrl.u32 %v2501, 16
        %v2516 = vpack.i.b16 %v2515, %v2514
        %v2519 = vpack.i.b16 %v2490, %v2483
        %v2520 = vshrl.u32 %v2483, 16
        %v2521 = vshrl.u32 %v2490, 16
        %v2522 = vpack.i.b16 %v2521, %v2520
        %v2525 = vpack.i.b16 %v2504, %v2497
        %v2526 = vshrl.u32 %v2497, 16
        %v2527 = vshrl.u32 %v2504, 16
        %v2528 = vpack.i.b16 %v2527, %v2526
        %v2531 = vunpack.c.l.s4 1983009808
        %v2532 = vunpack.c.0.s8 %v2531
        %v2533 = vperm.slane %v2507, %v2532
        %v2536 = vunpack.c.l.s4 1983009808
        %v2537 = vunpack.c.0.s8 %v2536
        %v2538 = vperm.slane %v2513, %v2537
        %v2539 = vrot.slane %v2538, 4
        %v2540 = vsel %vm451, %v2539, %v2533
        %v2541 = vrot.slane %v2533, 4
        %v2542 = vsel %vm451, %v2538, %v2541
        %v2544 = vunpack.c.l.s4 1934713408
        %v2545 = vunpack.c.0.s8 %v2544
        %v2546 = vperm.slane %v2540, %v2545
        %v2548 = vunpack.c.l.s4 1934713408
        %v2549 = vunpack.c.0.s8 %v2548
        %v2550 = vperm.slane %v2542, %v2549
        %v2551 = vrot.slane %v2546, 4
        %v2552 = vsel %vm451, 0, %v2551
        %v2553 = vrot.slane %v2550, 4
        %v2554 = vsel %vm451, 0, %v2553
        %v2557 = vunpack.c.l.s4 1983009808
        %v2558 = vunpack.c.0.s8 %v2557
        %v2559 = vperm.slane %v2510, %v2558
        %v2562 = vunpack.c.l.s4 1983009808
        %v2563 = vunpack.c.0.s8 %v2562
        %v2564 = vperm.slane %v2516, %v2563
        %v2565 = vrot.slane %v2564, 4
        %v2566 = vsel %vm451, %v2565, %v2559
        %v2567 = vrot.slane %v2559, 4
        %v2568 = vsel %vm451, %v2564, %v2567
        %v2570 = vunpack.c.l.s4 1934713408
        %v2571 = vunpack.c.0.s8 %v2570
        %v2572 = vperm.slane %v2566, %v2571
        %v2574 = vunpack.c.l.s4 1934713408
        %v2575 = vunpack.c.0.s8 %v2574
        %v2576 = vperm.slane %v2568, %v2575
        %v2577 = vrot.slane %v2572, 4
        %v2578 = vsel %vm451, 0, %v2577
        %v2579 = vrot.slane %v2576, 4
        %v2580 = vsel %vm451, 0, %v2579
        %v2583 = vunpack.c.l.s4 1983009808
        %v2584 = vunpack.c.0.s8 %v2583
        %v2585 = vperm.slane %v2519, %v2584
        %v2588 = vunpack.c.l.s4 1983009808
        %v2589 = vunpack.c.0.s8 %v2588
        %v2590 = vperm.slane %v2525, %v2589
        %v2591 = vrot.slane %v2590, 4
        %v2592 = vsel %vm451, %v2591, %v2585
        %v2593 = vrot.slane %v2585, 4
        %v2594 = vsel %vm451, %v2590, %v2593
        %v2596 = vunpack.c.l.s4 1934713408
        %v2597 = vunpack.c.0.s8 %v2596
        %v2598 = vperm.slane %v2592, %v2597
        %v2600 = vunpack.c.l.s4 1934713408
        %v2601 = vunpack.c.0.s8 %v2600
        %v2602 = vperm.slane %v2594, %v2601
        %v2603 = vrot.slane %v2598, 4
        %v2604 = vsel %vm451, 0, %v2603
        %v2605 = vrot.slane %v2602, 4
        %v2606 = vsel %vm451, 0, %v2605
        %v2609 = vunpack.c.l.s4 1983009808
        %v2610 = vunpack.c.0.s8 %v2609
        %v2611 = vperm.slane %v2522, %v2610
        %v2614 = vunpack.c.l.s4 1983009808
        %v2615 = vunpack.c.0.s8 %v2614
        %v2616 = vperm.slane %v2528, %v2615
        %v2617 = vrot.slane %v2616, 4
        %v2618 = vsel %vm451, %v2617, %v2611
        %v2619 = vrot.slane %v2611, 4
        %v2620 = vsel %vm451, %v2616, %v2619
        %v2622 = vunpack.c.l.s4 1934713408
        %v2623 = vunpack.c.0.s8 %v2622
        %v2624 = vperm.slane %v2618, %v2623
        %v2626 = vunpack.c.l.s4 1934713408
        %v2627 = vunpack.c.0.s8 %v2626
        %v2628 = vperm.slane %v2620, %v2627
        %v2629 = vrot.slane %v2624, 4
        %v2630 = vsel %vm451, 0, %v2629
        %v2631 = vrot.slane %v2628, 4
        %v2632 = vsel %vm451, 0, %v2631
        %v2634 = vunpack.c.l.b16 %v2572
        %v2635 = vpack.c.b16 %v2634, %v2634
        %2636 = vrot.lane.b32.xlu0 %v2635, 16
        %v2637 = vpop.permute.xlu0 %2636
        %v2639 = vunpack.c.l.b16 %v2552
        %v2640 = vpack.c.b16 %v2639, %v2639
        %2641 = vrot.lane.b32.xlu0 %v2640, 32
        %v2642 = vpop.permute.xlu0 %2641
        %v2644 = vunpack.c.l.b16 %v2578
        %v2645 = vpack.c.b16 %v2644, %v2644
        %2646 = vrot.lane.b32.xlu0 %v2645, 48
        %v2647 = vpop.permute.xlu0 %2646
        %v2649 = vunpack.c.l.b16 %v2550
        %v2650 = vpack.c.b16 %v2649, %v2649
        %2651 = vrot.lane.b32.xlu0 %v2650, 64
        %v2652 = vpop.permute.xlu0 %2651
        %v2654 = vunpack.c.l.b16 %v2576
        %v2655 = vpack.c.b16 %v2654, %v2654
        %2656 = vrot.lane.b32.xlu0 %v2655, 80
        %v2657 = vpop.permute.xlu0 %2656
        %v2659 = vunpack.c.l.b16 %v2554
        %v2660 = vpack.c.b16 %v2659, %v2659
        %2661 = vrot.lane.b32.xlu0 %v2660, 96
        %v2662 = vpop.permute.xlu0 %2661
        %v2664 = vunpack.c.l.b16 %v2580
        %v2665 = vpack.c.b16 %v2664, %v2664
        %2666 = vrot.lane.b32.xlu0 %v2665, 112
        %v2667 = vpop.permute.xlu0 %2666
        %v2669 = vunpack.c.l.b16 %v2624
        %v2670 = vpack.c.b16 %v2669, %v2669
        %2671 = vrot.lane.b32.xlu0 %v2670, 16
        %v2672 = vpop.permute.xlu0 %2671
        %v2674 = vunpack.c.l.b16 %v2604
        %v2675 = vpack.c.b16 %v2674, %v2674
        %2676 = vrot.lane.b32.xlu0 %v2675, 32
        %v2677 = vpop.permute.xlu0 %2676
        %v2679 = vunpack.c.l.b16 %v2630
        %v2680 = vpack.c.b16 %v2679, %v2679
        %2681 = vrot.lane.b32.xlu0 %v2680, 48
        %v2682 = vpop.permute.xlu0 %2681
        %v2684 = vunpack.c.l.b16 %v2602
        %v2685 = vpack.c.b16 %v2684, %v2684
        %2686 = vrot.lane.b32.xlu0 %v2685, 64
        %v2687 = vpop.permute.xlu0 %2686
        %v2689 = vunpack.c.l.b16 %v2628
        %v2690 = vpack.c.b16 %v2689, %v2689
        %2691 = vrot.lane.b32.xlu0 %v2690, 80
        %v2692 = vpop.permute.xlu0 %2691
        %v2694 = vunpack.c.l.b16 %v2606
        %v2695 = vpack.c.b16 %v2694, %v2694
        %2696 = vrot.lane.b32.xlu0 %v2695, 96
        %v2697 = vpop.permute.xlu0 %2696
        %v2699 = vunpack.c.l.b16 %v2632
        %v2700 = vpack.c.b16 %v2699, %v2699
        %2701 = vrot.lane.b32.xlu0 %v2700, 112
        %v2702 = vpop.permute.xlu0 %2701
        %v2705 = vsel %vm615, %v2546, %v2637
        %v2707 = vsel %vm619, %v2705, %v2642
        %v2709 = vsel %vm622, %v2707, %v2647
        %v2711 = vsel %vm625, %v2709, %v2652
        %v2713 = vsel %vm628, %v2711, %v2657
        %v2715 = vsel %vm631, %v2713, %v2662
        %v2717 = vsel %vm634, %v2715, %v2667
        %v2720 = vsel %vm615, %v2598, %v2672
        %v2722 = vsel %vm619, %v2720, %v2677
        %v2724 = vsel %vm622, %v2722, %v2682
        %v2726 = vsel %vm625, %v2724, %v2687
        %v2728 = vsel %vm628, %v2726, %v2692
        %v2730 = vsel %vm631, %v2728, %v2697
        %v2732 = vsel %vm634, %v2730, %v2702
        %2733 = vrot.lane.b32.xlu0 %v908, 104
        %v2734 = vpop.permute.xlu0 %2733
        %v2736 = vsel %vm911, %v2734, 0
        %v2738 = vsel %vm915, %v2717, 0
        %v2740 = vsel %vm915, %v2732, 0
        %2742 = vmatpush.bf16.msra.mxu0 0
        %2743 = vmatpush.bf16.msra.mxu0 0
        %2744 = vmatpush.bf16.msra.mxu0 0
        %2745 = vmatpush.bf16.msra.mxu0 0
        %2746 = vmatpush.bf16.msra.mxu0 0
        %2747 = vmatpush.bf16.msra.mxu0 0
        %2748 = vmatpush.bf16.msra.mxu0 0
        %2749 = vmatpush.bf16.msra.mxu0 %v2738
        %2750 = vmatmul.bf16.gmra.mxu0 %v2736
        %v2751 = vpop.f32.mrf.mxu0
        %v2752 = vadd.f32 0.0, %v2751
        %v2753 = vpop.f32.mrf.mxu0
        %v2754 = vadd.f32 0.0, %v2753
        %2755 = vdwg.mxu0
        %2756 = vmatpush.bf16.msra.mxu0 0
        %2757 = vmatpush.bf16.msra.mxu0 0
        %2758 = vmatpush.bf16.msra.mxu0 0
        %2759 = vmatpush.bf16.msra.mxu0 0
        %2760 = vmatpush.bf16.msra.mxu0 0
        %2761 = vmatpush.bf16.msra.mxu0 0
        %2762 = vmatpush.bf16.msra.mxu0 0
        %2763 = vmatpush.bf16.msra.mxu0 %v2740
        %2764 = vmatmul.bf16.gmra.mxu0 %v2736
        %v2765 = vpop.f32.mrf.mxu0
        %v2766 = vadd.f32 0.0, %v2765
        %v2767 = vpop.f32.mrf.mxu0
        %v2768 = vadd.f32 0.0, %v2767
        %2769 = vdwg.mxu0
        %v2770 = vadd.f32 %v2446, %v2752
        %v2771 = vadd.f32 %v2447, %v2766
        %v2772 = vadd.f32 %v2448, %v2754
        %v2773 = vadd.f32 %v2449, %v2768
        %v2774 = vld [vmem:[#allocation2] sm:$0xe]
        %v2775 = vld [vmem:[#allocation2 + $0x4] sm:$0xf]
        %v2776 = vld [vmem:[#allocation2 + $0x8] sm:$0x1]
        %v2777 = vld [vmem:[#allocation2 + $0xc] sm:$0xe]
        %v2778 = vld [vmem:[#allocation2 + $0x10] sm:$0xf]
        %v2779 = vld [vmem:[#allocation2 + $0x14] sm:$0x1]
        %v2780 = vld [vmem:[#allocation2 + $0x18] sm:$0xe]
        %v2781 = vld [vmem:[#allocation2 + $0x1c] sm:$0xf]
        %v2782 = vld [vmem:[#allocation2 + $0x20] sm:$0x1]
        %v2783 = vld [vmem:[#allocation2 + $0x24] sm:$0xe]
        %v2784 = vld [vmem:[#allocation2 + $0x28] sm:$0xf]
        %v2785 = vld [vmem:[#allocation2 + $0x2c] sm:$0x1]
        %v2798 = vrot.slane %v2774, 5
        %v2799 = vrot.slane %v2798, 4
        %v2800 = vrot.slane %v2775, 5
        %v2801 = vsel %vm2476, %v2799, %v2800
        %v2802 = vrot.slane %v2800, 4
        %v2803 = vrot.slane %v2776, 5
        %v2804 = vsel %vm2476, %v2802, %v2803
        %v2805 = vrot.slane %v2777, 5
        %v2806 = vrot.slane %v2805, 4
        %v2807 = vrot.slane %v2778, 5
        %v2808 = vsel %vm2476, %v2806, %v2807
        %v2809 = vrot.slane %v2807, 4
        %v2810 = vrot.slane %v2779, 5
        %v2811 = vsel %vm2476, %v2809, %v2810
        %v2812 = vrot.slane %v2780, 5
        %v2813 = vrot.slane %v2812, 4
        %v2814 = vrot.slane %v2781, 5
        %v2815 = vsel %vm2476, %v2813, %v2814
        %v2816 = vrot.slane %v2814, 4
        %v2817 = vrot.slane %v2782, 5
        %v2818 = vsel %vm2476, %v2816, %v2817
        %v2819 = vrot.slane %v2783, 5
        %v2820 = vrot.slane %v2819, 4
        %v2821 = vrot.slane %v2784, 5
        %v2822 = vsel %vm2476, %v2820, %v2821
        %v2823 = vrot.slane %v2821, 4
        %v2824 = vrot.slane %v2785, 5
        %v2825 = vsel %vm2476, %v2823, %v2824
        %2826 = vrot.lane.b32.xlu0 %v2801, 127
        %v2827 = vpop.permute.xlu0 %2826
        %2828 = vrot.lane.b32.xlu0 %v2804, 127
        %v2829 = vpop.permute.xlu0 %2828
        %2830 = vrot.lane.b32.xlu0 %v2808, 127
        %v2831 = vpop.permute.xlu0 %2830
        %2832 = vrot.lane.b32.xlu0 %v2811, 127
        %v2833 = vpop.permute.xlu0 %2832
        %2834 = vrot.lane.b32.xlu0 %v2815, 127
        %v2835 = vpop.permute.xlu0 %2834
        %2836 = vrot.lane.b32.xlu0 %v2818, 127
        %v2837 = vpop.permute.xlu0 %2836
        %2838 = vrot.lane.b32.xlu0 %v2822, 127
        %v2839 = vpop.permute.xlu0 %2838
        %2840 = vrot.lane.b32.xlu0 %v2825, 127
        %v2841 = vpop.permute.xlu0 %2840
        %v2844 = vpack.i.b16 %v2831, %v2827
        %v2845 = vshrl.u32 %v2827, 16
        %v2846 = vshrl.u32 %v2831, 16
        %v2847 = vpack.i.b16 %v2846, %v2845
        %v2850 = vpack.i.b16 %v2839, %v2835
        %v2851 = vshrl.u32 %v2835, 16
        %v2852 = vshrl.u32 %v2839, 16
        %v2853 = vpack.i.b16 %v2852, %v2851
        %v2856 = vpack.i.b16 %v2833, %v2829
        %v2857 = vshrl.u32 %v2829, 16
        %v2858 = vshrl.u32 %v2833, 16
        %v2859 = vpack.i.b16 %v2858, %v2857
        %v2862 = vpack.i.b16 %v2841, %v2837
        %v2863 = vshrl.u32 %v2837, 16
        %v2864 = vshrl.u32 %v2841, 16
        %v2865 = vpack.i.b16 %v2864, %v2863
        %v2868 = vunpack.c.l.s4 1983009808
        %v2869 = vunpack.c.0.s8 %v2868
        %v2870 = vperm.slane %v2844, %v2869
        %v2873 = vunpack.c.l.s4 1983009808
        %v2874 = vunpack.c.0.s8 %v2873
        %v2875 = vperm.slane %v2850, %v2874
        %v2876 = vrot.slane %v2875, 4
        %v2877 = vsel %vm451, %v2876, %v2870
        %v2878 = vrot.slane %v2870, 4
        %v2879 = vsel %vm451, %v2875, %v2878
        %v2881 = vunpack.c.l.s4 1934713408
        %v2882 = vunpack.c.0.s8 %v2881
        %v2883 = vperm.slane %v2877, %v2882
        %v2885 = vunpack.c.l.s4 1934713408
        %v2886 = vunpack.c.0.s8 %v2885
        %v2887 = vperm.slane %v2879, %v2886
        %v2888 = vrot.slane %v2883, 4
        %v2889 = vsel %vm451, 0, %v2888
        %v2890 = vrot.slane %v2887, 4
        %v2891 = vsel %vm451, 0, %v2890
        %v2894 = vunpack.c.l.s4 1983009808
        %v2895 = vunpack.c.0.s8 %v2894
        %v2896 = vperm.slane %v2847, %v2895
        %v2899 = vunpack.c.l.s4 1983009808
        %v2900 = vunpack.c.0.s8 %v2899
        %v2901 = vperm.slane %v2853, %v2900
        %v2902 = vrot.slane %v2901, 4
        %v2903 = vsel %vm451, %v2902, %v2896
        %v2904 = vrot.slane %v2896, 4
        %v2905 = vsel %vm451, %v2901, %v2904
        %v2907 = vunpack.c.l.s4 1934713408
        %v2908 = vunpack.c.0.s8 %v2907
        %v2909 = vperm.slane %v2903, %v2908
        %v2911 = vunpack.c.l.s4 1934713408
        %v2912 = vunpack.c.0.s8 %v2911
        %v2913 = vperm.slane %v2905, %v2912
        %v2914 = vrot.slane %v2909, 4
        %v2915 = vsel %vm451, 0, %v2914
        %v2916 = vrot.slane %v2913, 4
        %v2917 = vsel %vm451, 0, %v2916
        %v2920 = vunpack.c.l.s4 1983009808
        %v2921 = vunpack.c.0.s8 %v2920
        %v2922 = vperm.slane %v2856, %v2921
        %v2925 = vunpack.c.l.s4 1983009808
        %v2926 = vunpack.c.0.s8 %v2925
        %v2927 = vperm.slane %v2862, %v2926
        %v2928 = vrot.slane %v2927, 4
        %v2929 = vsel %vm451, %v2928, %v2922
        %v2930 = vrot.slane %v2922, 4
        %v2931 = vsel %vm451, %v2927, %v2930
        %v2933 = vunpack.c.l.s4 1934713408
        %v2934 = vunpack.c.0.s8 %v2933
        %v2935 = vperm.slane %v2929, %v2934
        %v2937 = vunpack.c.l.s4 1934713408
        %v2938 = vunpack.c.0.s8 %v2937
        %v2939 = vperm.slane %v2931, %v2938
        %v2940 = vrot.slane %v2935, 4
        %v2941 = vsel %vm451, 0, %v2940
        %v2942 = vrot.slane %v2939, 4
        %v2943 = vsel %vm451, 0, %v2942
        %v2946 = vunpack.c.l.s4 1983009808
        %v2947 = vunpack.c.0.s8 %v2946
        %v2948 = vperm.slane %v2859, %v2947
        %v2951 = vunpack.c.l.s4 1983009808
        %v2952 = vunpack.c.0.s8 %v2951
        %v2953 = vperm.slane %v2865, %v2952
        %v2954 = vrot.slane %v2953, 4
        %v2955 = vsel %vm451, %v2954, %v2948
        %v2956 = vrot.slane %v2948, 4
        %v2957 = vsel %vm451, %v2953, %v2956
        %v2959 = vunpack.c.l.s4 1934713408
        %v2960 = vunpack.c.0.s8 %v2959
        %v2961 = vperm.slane %v2955, %v2960
        %v2963 = vunpack.c.l.s4 1934713408
        %v2964 = vunpack.c.0.s8 %v2963
        %v2965 = vperm.slane %v2957, %v2964
        %v2966 = vrot.slane %v2961, 4
        %v2967 = vsel %vm451, 0, %v2966
        %v2968 = vrot.slane %v2965, 4
        %v2969 = vsel %vm451, 0, %v2968
        %v2971 = vunpack.c.l.b16 %v2909
        %v2972 = vpack.c.b16 %v2971, %v2971
        %2973 = vrot.lane.b32.xlu0 %v2972, 16
        %v2974 = vpop.permute.xlu0 %2973
        %v2976 = vunpack.c.l.b16 %v2889
        %v2977 = vpack.c.b16 %v2976, %v2976
        %2978 = vrot.lane.b32.xlu0 %v2977, 32
        %v2979 = vpop.permute.xlu0 %2978
        %v2981 = vunpack.c.l.b16 %v2915
        %v2982 = vpack.c.b16 %v2981, %v2981
        %2983 = vrot.lane.b32.xlu0 %v2982, 48
        %v2984 = vpop.permute.xlu0 %2983
        %v2986 = vunpack.c.l.b16 %v2887
        %v2987 = vpack.c.b16 %v2986, %v2986
        %2988 = vrot.lane.b32.xlu0 %v2987, 64
        %v2989 = vpop.permute.xlu0 %2988
        %v2991 = vunpack.c.l.b16 %v2913
        %v2992 = vpack.c.b16 %v2991, %v2991
        %2993 = vrot.lane.b32.xlu0 %v2992, 80
        %v2994 = vpop.permute.xlu0 %2993
        %v2996 = vunpack.c.l.b16 %v2891
        %v2997 = vpack.c.b16 %v2996, %v2996
        %2998 = vrot.lane.b32.xlu0 %v2997, 96
        %v2999 = vpop.permute.xlu0 %2998
        %v3001 = vunpack.c.l.b16 %v2917
        %v3002 = vpack.c.b16 %v3001, %v3001
        %3003 = vrot.lane.b32.xlu0 %v3002, 112
        %v3004 = vpop.permute.xlu0 %3003
        %v3006 = vunpack.c.l.b16 %v2961
        %v3007 = vpack.c.b16 %v3006, %v3006
        %3008 = vrot.lane.b32.xlu0 %v3007, 16
        %v3009 = vpop.permute.xlu0 %3008
        %v3011 = vunpack.c.l.b16 %v2941
        %v3012 = vpack.c.b16 %v3011, %v3011
        %3013 = vrot.lane.b32.xlu0 %v3012, 32
        %v3014 = vpop.permute.xlu0 %3013
        %v3016 = vunpack.c.l.b16 %v2967
        %v3017 = vpack.c.b16 %v3016, %v3016
        %3018 = vrot.lane.b32.xlu0 %v3017, 48
        %v3019 = vpop.permute.xlu0 %3018
        %v3021 = vunpack.c.l.b16 %v2939
        %v3022 = vpack.c.b16 %v3021, %v3021
        %3023 = vrot.lane.b32.xlu0 %v3022, 64
        %v3024 = vpop.permute.xlu0 %3023
        %v3026 = vunpack.c.l.b16 %v2965
        %v3027 = vpack.c.b16 %v3026, %v3026
        %3028 = vrot.lane.b32.xlu0 %v3027, 80
        %v3029 = vpop.permute.xlu0 %3028
        %v3031 = vunpack.c.l.b16 %v2943
        %v3032 = vpack.c.b16 %v3031, %v3031
        %3033 = vrot.lane.b32.xlu0 %v3032, 96
        %v3034 = vpop.permute.xlu0 %3033
        %v3036 = vunpack.c.l.b16 %v2969
        %v3037 = vpack.c.b16 %v3036, %v3036
        %3038 = vrot.lane.b32.xlu0 %v3037, 112
        %v3039 = vpop.permute.xlu0 %3038
        %v3042 = vsel %vm615, %v2883, %v2974
        %v3044 = vsel %vm619, %v3042, %v2979
        %v3046 = vsel %vm622, %v3044, %v2984
        %v3048 = vsel %vm625, %v3046, %v2989
        %v3050 = vsel %vm628, %v3048, %v2994
        %v3052 = vsel %vm631, %v3050, %v2999
        %v3054 = vsel %vm634, %v3052, %v3004
        %v3057 = vsel %vm615, %v2935, %v3009
        %v3059 = vsel %vm619, %v3057, %v3014
        %v3061 = vsel %vm622, %v3059, %v3019
        %v3063 = vsel %vm625, %v3061, %v3024
        %v3065 = vsel %vm628, %v3063, %v3029
        %v3067 = vsel %vm631, %v3065, %v3034
        %v3069 = vsel %vm634, %v3067, %v3039
        %3070 = vrot.lane.b32.xlu0 %v908, 100
        %v3071 = vpop.permute.xlu0 %3070
        %v3073 = vsel %vm911, %v3071, 0
        %v3075 = vsel %vm915, %v3054, 0
        %v3077 = vsel %vm915, %v3069, 0
        %3079 = vmatpush.bf16.msra.mxu0 0
        %3080 = vmatpush.bf16.msra.mxu0 0
        %3081 = vmatpush.bf16.msra.mxu0 0
        %3082 = vmatpush.bf16.msra.mxu0 0
        %3083 = vmatpush.bf16.msra.mxu0 0
        %3084 = vmatpush.bf16.msra.mxu0 0
        %3085 = vmatpush.bf16.msra.mxu0 0
        %3086 = vmatpush.bf16.msra.mxu0 %v3075
        %3087 = vmatmul.bf16.gmra.mxu0 %v3073
        %v3088 = vpop.f32.mrf.mxu0
        %v3089 = vadd.f32 0.0, %v3088
        %v3090 = vpop.f32.mrf.mxu0
        %v3091 = vadd.f32 0.0, %v3090
        %3092 = vdwg.mxu0
        %3093 = vmatpush.bf16.msra.mxu0 0
        %3094 = vmatpush.bf16.msra.mxu0 0
        %3095 = vmatpush.bf16.msra.mxu0 0
        %3096 = vmatpush.bf16.msra.mxu0 0
        %3097 = vmatpush.bf16.msra.mxu0 0
        %3098 = vmatpush.bf16.msra.mxu0 0
        %3099 = vmatpush.bf16.msra.mxu0 0
        %3100 = vmatpush.bf16.msra.mxu0 %v3077
        %3101 = vmatmul.bf16.gmra.mxu0 %v3073
        %v3102 = vpop.f32.mrf.mxu0
        %v3103 = vadd.f32 0.0, %v3102
        %v3104 = vpop.f32.mrf.mxu0
        %v3105 = vadd.f32 0.0, %v3104
        %3106 = vdwg.mxu0
        %v3107 = vadd.f32 %v2770, %v3089
        %v3108 = vadd.f32 %v2771, %v3103
        %v3109 = vadd.f32 %v2772, %v3091
        %v3110 = vadd.f32 %v2773, %v3105
        %v3111 = vld [vmem:[#allocation2] sm:$0xe]
        %v3112 = vld [vmem:[#allocation2 + $0x4] sm:$0xf]
        %v3113 = vld [vmem:[#allocation2 + $0x8] sm:$0x1]
        %v3114 = vld [vmem:[#allocation2 + $0xc] sm:$0xe]
        %v3115 = vld [vmem:[#allocation2 + $0x10] sm:$0xf]
        %v3116 = vld [vmem:[#allocation2 + $0x14] sm:$0x1]
        %v3117 = vld [vmem:[#allocation2 + $0x18] sm:$0xe]
        %v3118 = vld [vmem:[#allocation2 + $0x1c] sm:$0xf]
        %v3119 = vld [vmem:[#allocation2 + $0x20] sm:$0x1]
        %v3120 = vld [vmem:[#allocation2 + $0x24] sm:$0xe]
        %v3121 = vld [vmem:[#allocation2 + $0x28] sm:$0xf]
        %v3122 = vld [vmem:[#allocation2 + $0x2c] sm:$0x1]
        %v3135 = vrot.slane %v3111, 5
        %v3136 = vrot.slane %v3135, 4
        %v3137 = vrot.slane %v3112, 5
        %v3138 = vsel %vm2476, %v3136, %v3137
        %v3139 = vrot.slane %v3137, 4
        %v3140 = vrot.slane %v3113, 5
        %v3141 = vsel %vm2476, %v3139, %v3140
        %v3142 = vrot.slane %v3114, 5
        %v3143 = vrot.slane %v3142, 4
        %v3144 = vrot.slane %v3115, 5
        %v3145 = vsel %vm2476, %v3143, %v3144
        %v3146 = vrot.slane %v3144, 4
        %v3147 = vrot.slane %v3116, 5
        %v3148 = vsel %vm2476, %v3146, %v3147
        %v3149 = vrot.slane %v3117, 5
        %v3150 = vrot.slane %v3149, 4
        %v3151 = vrot.slane %v3118, 5
        %v3152 = vsel %vm2476, %v3150, %v3151
        %v3153 = vrot.slane %v3151, 4
        %v3154 = vrot.slane %v3119, 5
        %v3155 = vsel %vm2476, %v3153, %v3154
        %v3156 = vrot.slane %v3120, 5
        %v3157 = vrot.slane %v3156, 4
        %v3158 = vrot.slane %v3121, 5
        %v3159 = vsel %vm2476, %v3157, %v3158
        %v3160 = vrot.slane %v3158, 4
        %v3161 = vrot.slane %v3122, 5
        %v3162 = vsel %vm2476, %v3160, %v3161
        %3163 = vrot.lane.b32.xlu0 %v3138, 126
        %v3164 = vpop.permute.xlu0 %3163
        %3165 = vrot.lane.b32.xlu0 %v3141, 126
        %v3166 = vpop.permute.xlu0 %3165
        %3167 = vrot.lane.b32.xlu0 %v3145, 126
        %v3168 = vpop.permute.xlu0 %3167
        %3169 = vrot.lane.b32.xlu0 %v3148, 126
        %v3170 = vpop.permute.xlu0 %3169
        %3171 = vrot.lane.b32.xlu0 %v3152, 126
        %v3172 = vpop.permute.xlu0 %3171
        %3173 = vrot.lane.b32.xlu0 %v3155, 126
        %v3174 = vpop.permute.xlu0 %3173
        %3175 = vrot.lane.b32.xlu0 %v3159, 126
        %v3176 = vpop.permute.xlu0 %3175
        %3177 = vrot.lane.b32.xlu0 %v3162, 126
        %v3178 = vpop.permute.xlu0 %3177
        %v3181 = vpack.i.b16 %v3168, %v3164
        %v3182 = vshrl.u32 %v3164, 16
        %v3183 = vshrl.u32 %v3168, 16
        %v3184 = vpack.i.b16 %v3183, %v3182
        %v3187 = vpack.i.b16 %v3176, %v3172
        %v3188 = vshrl.u32 %v3172, 16
        %v3189 = vshrl.u32 %v3176, 16
        %v3190 = vpack.i.b16 %v3189, %v3188
        %v3193 = vpack.i.b16 %v3170, %v3166
        %v3194 = vshrl.u32 %v3166, 16
        %v3195 = vshrl.u32 %v3170, 16
        %v3196 = vpack.i.b16 %v3195, %v3194
        %v3199 = vpack.i.b16 %v3178, %v3174
        %v3200 = vshrl.u32 %v3174, 16
        %v3201 = vshrl.u32 %v3178, 16
        %v3202 = vpack.i.b16 %v3201, %v3200
        %v3205 = vunpack.c.l.s4 1983009808
        %v3206 = vunpack.c.0.s8 %v3205
        %v3207 = vperm.slane %v3181, %v3206
        %v3210 = vunpack.c.l.s4 1983009808
        %v3211 = vunpack.c.0.s8 %v3210
        %v3212 = vperm.slane %v3187, %v3211
        %v3213 = vrot.slane %v3212, 4
        %v3214 = vsel %vm451, %v3213, %v3207
        %v3215 = vrot.slane %v3207, 4
        %v3216 = vsel %vm451, %v3212, %v3215
        %v3218 = vunpack.c.l.s4 1934713408
        %v3219 = vunpack.c.0.s8 %v3218
        %v3220 = vperm.slane %v3214, %v3219
        %v3222 = vunpack.c.l.s4 1934713408
        %v3223 = vunpack.c.0.s8 %v3222
        %v3224 = vperm.slane %v3216, %v3223
        %v3225 = vrot.slane %v3220, 4
        %v3226 = vsel %vm451, 0, %v3225
        %v3227 = vrot.slane %v3224, 4
        %v3228 = vsel %vm451, 0, %v3227
        %v3231 = vunpack.c.l.s4 1983009808
        %v3232 = vunpack.c.0.s8 %v3231
        %v3233 = vperm.slane %v3184, %v3232
        %v3236 = vunpack.c.l.s4 1983009808
        %v3237 = vunpack.c.0.s8 %v3236
        %v3238 = vperm.slane %v3190, %v3237
        %v3239 = vrot.slane %v3238, 4
        %v3240 = vsel %vm451, %v3239, %v3233
        %v3241 = vrot.slane %v3233, 4
        %v3242 = vsel %vm451, %v3238, %v3241
        %v3244 = vunpack.c.l.s4 1934713408
        %v3245 = vunpack.c.0.s8 %v3244
        %v3246 = vperm.slane %v3240, %v3245
        %v3248 = vunpack.c.l.s4 1934713408
        %v3249 = vunpack.c.0.s8 %v3248
        %v3250 = vperm.slane %v3242, %v3249
        %v3251 = vrot.slane %v3246, 4
        %v3252 = vsel %vm451, 0, %v3251
        %v3253 = vrot.slane %v3250, 4
        %v3254 = vsel %vm451, 0, %v3253
        %v3257 = vunpack.c.l.s4 1983009808
        %v3258 = vunpack.c.0.s8 %v3257
        %v3259 = vperm.slane %v3193, %v3258
        %v3262 = vunpack.c.l.s4 1983009808
        %v3263 = vunpack.c.0.s8 %v3262
        %v3264 = vperm.slane %v3199, %v3263
        %v3265 = vrot.slane %v3264, 4
        %v3266 = vsel %vm451, %v3265, %v3259
        %v3267 = vrot.slane %v3259, 4
        %v3268 = vsel %vm451, %v3264, %v3267
        %v3270 = vunpack.c.l.s4 1934713408
        %v3271 = vunpack.c.0.s8 %v3270
        %v3272 = vperm.slane %v3266, %v3271
        %v3274 = vunpack.c.l.s4 1934713408
        %v3275 = vunpack.c.0.s8 %v3274
        %v3276 = vperm.slane %v3268, %v3275
        %v3277 = vrot.slane %v3272, 4
        %v3278 = vsel %vm451, 0, %v3277
        %v3279 = vrot.slane %v3276, 4
        %v3280 = vsel %vm451, 0, %v3279
        %v3283 = vunpack.c.l.s4 1983009808
        %v3284 = vunpack.c.0.s8 %v3283
        %v3285 = vperm.slane %v3196, %v3284
        %v3288 = vunpack.c.l.s4 1983009808
        %v3289 = vunpack.c.0.s8 %v3288
        %v3290 = vperm.slane %v3202, %v3289
        %v3291 = vrot.slane %v3290, 4
        %v3292 = vsel %vm451, %v3291, %v3285
        %v3293 = vrot.slane %v3285, 4
        %v3294 = vsel %vm451, %v3290, %v3293
        %v3296 = vunpack.c.l.s4 1934713408
        %v3297 = vunpack.c.0.s8 %v3296
        %v3298 = vperm.slane %v3292, %v3297
        %v3300 = vunpack.c.l.s4 1934713408
        %v3301 = vunpack.c.0.s8 %v3300
        %v3302 = vperm.slane %v3294, %v3301
        %v3303 = vrot.slane %v3298, 4
        %v3304 = vsel %vm451, 0, %v3303
        %v3305 = vrot.slane %v3302, 4
        %v3306 = vsel %vm451, 0, %v3305
        %v3308 = vunpack.c.l.b16 %v3246
        %v3309 = vpack.c.b16 %v3308, %v3308
        %3310 = vrot.lane.b32.xlu0 %v3309, 16
        %v3311 = vpop.permute.xlu0 %3310
        %v3313 = vunpack.c.l.b16 %v3226
        %v3314 = vpack.c.b16 %v3313, %v3313
        %3315 = vrot.lane.b32.xlu0 %v3314, 32
        %v3316 = vpop.permute.xlu0 %3315
        %v3318 = vunpack.c.l.b16 %v3252
        %v3319 = vpack.c.b16 %v3318, %v3318
        %3320 = vrot.lane.b32.xlu0 %v3319, 48
        %v3321 = vpop.permute.xlu0 %3320
        %v3323 = vunpack.c.l.b16 %v3224
        %v3324 = vpack.c.b16 %v3323, %v3323
        %3325 = vrot.lane.b32.xlu0 %v3324, 64
        %v3326 = vpop.permute.xlu0 %3325
        %v3328 = vunpack.c.l.b16 %v3250
        %v3329 = vpack.c.b16 %v3328, %v3328
        %3330 = vrot.lane.b32.xlu0 %v3329, 80
        %v3331 = vpop.permute.xlu0 %3330
        %v3333 = vunpack.c.l.b16 %v3228
        %v3334 = vpack.c.b16 %v3333, %v3333
        %3335 = vrot.lane.b32.xlu0 %v3334, 96
        %v3336 = vpop.permute.xlu0 %3335
        %v3338 = vunpack.c.l.b16 %v3254
        %v3339 = vpack.c.b16 %v3338, %v3338
        %3340 = vrot.lane.b32.xlu0 %v3339, 112
        %v3341 = vpop.permute.xlu0 %3340
        %v3343 = vunpack.c.l.b16 %v3298
        %v3344 = vpack.c.b16 %v3343, %v3343
        %3345 = vrot.lane.b32.xlu0 %v3344, 16
        %v3346 = vpop.permute.xlu0 %3345
        %v3348 = vunpack.c.l.b16 %v3278
        %v3349 = vpack.c.b16 %v3348, %v3348
        %3350 = vrot.lane.b32.xlu0 %v3349, 32
        %v3351 = vpop.permute.xlu0 %3350
        %v3353 = vunpack.c.l.b16 %v3304
        %v3354 = vpack.c.b16 %v3353, %v3353
        %3355 = vrot.lane.b32.xlu0 %v3354, 48
        %v3356 = vpop.permute.xlu0 %3355
        %v3358 = vunpack.c.l.b16 %v3276
        %v3359 = vpack.c.b16 %v3358, %v3358
        %3360 = vrot.lane.b32.xlu0 %v3359, 64
        %v3361 = vpop.permute.xlu0 %3360
        %v3363 = vunpack.c.l.b16 %v3302
        %v3364 = vpack.c.b16 %v3363, %v3363
        %3365 = vrot.lane.b32.xlu0 %v3364, 80
        %v3366 = vpop.permute.xlu0 %3365
        %v3368 = vunpack.c.l.b16 %v3280
        %v3369 = vpack.c.b16 %v3368, %v3368
        %3370 = vrot.lane.b32.xlu0 %v3369, 96
        %v3371 = vpop.permute.xlu0 %3370
        %v3373 = vunpack.c.l.b16 %v3306
        %v3374 = vpack.c.b16 %v3373, %v3373
        %3375 = vrot.lane.b32.xlu0 %v3374, 112
        %v3376 = vpop.permute.xlu0 %3375
        %v3379 = vsel %vm615, %v3220, %v3311
        %v3381 = vsel %vm619, %v3379, %v3316
        %v3383 = vsel %vm622, %v3381, %v3321
        %v3385 = vsel %vm625, %v3383, %v3326
        %v3387 = vsel %vm628, %v3385, %v3331
        %v3389 = vsel %vm631, %v3387, %v3336
        %v3391 = vsel %vm634, %v3389, %v3341
        %v3394 = vsel %vm615, %v3272, %v3346
        %v3396 = vsel %vm619, %v3394, %v3351
        %v3398 = vsel %vm622, %v3396, %v3356
        %v3400 = vsel %vm625, %v3398, %v3361
        %v3402 = vsel %vm628, %v3400, %v3366
        %v3404 = vsel %vm631, %v3402, %v3371
        %v3406 = vsel %vm634, %v3404, %v3376
        %3407 = vrot.lane.b32.xlu0 %v908, 96
        %v3408 = vpop.permute.xlu0 %3407
        %v3410 = vsel %vm911, %v3408, 0
        %v3412 = vsel %vm915, %v3391, 0
        %v3414 = vsel %vm915, %v3406, 0
        %3416 = vmatpush.bf16.msra.mxu0 0
        %3417 = vmatpush.bf16.msra.mxu0 0
        %3418 = vmatpush.bf16.msra.mxu0 0
        %3419 = vmatpush.bf16.msra.mxu0 0
        %3420 = vmatpush.bf16.msra.mxu0 0
        %3421 = vmatpush.bf16.msra.mxu0 0
        %3422 = vmatpush.bf16.msra.mxu0 0
        %3423 = vmatpush.bf16.msra.mxu0 %v3412
        %3424 = vmatmul.bf16.gmra.mxu0 %v3410
        %v3425 = vpop.f32.mrf.mxu0
        %v3426 = vadd.f32 0.0, %v3425
        %v3427 = vpop.f32.mrf.mxu0
        %v3428 = vadd.f32 0.0, %v3427
        %3429 = vdwg.mxu0
        %3430 = vmatpush.bf16.msra.mxu0 0
        %3431 = vmatpush.bf16.msra.mxu0 0
        %3432 = vmatpush.bf16.msra.mxu0 0
        %3433 = vmatpush.bf16.msra.mxu0 0
        %3434 = vmatpush.bf16.msra.mxu0 0
        %3435 = vmatpush.bf16.msra.mxu0 0
        %3436 = vmatpush.bf16.msra.mxu0 0
        %3437 = vmatpush.bf16.msra.mxu0 %v3414
        %3438 = vmatmul.bf16.gmra.mxu0 %v3410
        %v3439 = vpop.f32.mrf.mxu0
        %v3440 = vadd.f32 0.0, %v3439
        %v3441 = vpop.f32.mrf.mxu0
        %v3442 = vadd.f32 0.0, %v3441
        %3443 = vdwg.mxu0
        %v3444 = vadd.f32 %v3107, %v3426
        %v3445 = vadd.f32 %v3108, %v3440
        %v3446 = vadd.f32 %v3109, %v3428
        %v3447 = vadd.f32 %v3110, %v3442
        %3449 = vset.pattern.permute.xlu0 0
        %3450 = vperm.xlu0 %3449, %v406
        %v3451 = vpop.permute.xlu0 %3450
        %3454 = vset.pattern.permute.xlu0 0
        %3455 = vperm.xlu0 %3454, %v407
        %v3456 = vpop.permute.xlu0 %3455
        %v3458 = vadd.f32 %v3444, %v3451
        %v3459 = vadd.f32 %v3445, %v3451
        %v3460 = vadd.f32 %v3446, %v3456
        %v3461 = vadd.f32 %v3447, %v3456
        %3462 = vst [vmem:[%s190] sm:$0xff] %v3458
        %3463 = vst [vmem:[%s190 + $0x8] sm:$0xff] %v3459
        %3464 = vst [vmem:[%s190 + $0x10] sm:$0xff] %v3460
        %3465 = vst [vmem:[%s190 + $0x18] sm:$0xff] %v3461
        %s3466 = sand.u32 %s96, 1
        %s3467 = scalar_lea.sflag [#allocation5], %s3466
        %s3468 = sand.u32 %s96, 1
        %s3469 = smul.addr %s3468, 32
        %s3470 = scalar_lea.vmem [#allocation6], %s3469
        // Predicated region
        $region37: #{tpu_custom_call.1} parent=31 // pred_check
          %p3471 = pneg %p106
        $region38: #{tpu_custom_call.1} parent=31 // pred_check_branch
          %3473 = sbr.rel (%p3471) target = $region40
        $region39: #{tpu_custom_call.1} parent=31 // pred_region
          %3475 = vsyncadd %s3467, 0
          %s3476 = smul.addr %s20, 4
          %s3477 = smul.addr %s3476, 8
          %s3478 = scalar_lea.hbm %s3, %s3477
          %s3479 = sshll.u32 %s3470, 4
          %s3480 = int_to_ptr.vmem [resolvable:$true] %s3479
          %s3481 = sshll.u32 %s3478, 4
          %s3482 = int_to_ptr.hbm [resolvable:$true] %s3481
          %3487 = dma.vmem_to_hbm [thread:$0]  %s3480, 512, %s3482, %s3467, 256, 256, 16
        $region40: #{tpu_custom_call.1} parent=31 // pred_fallthru
          _
      $region32: #{tpu_custom_call.1} parent=5 // pred_fallthru
        _
      %p3488 = scmp.le.s32.totalorder 2, %s15
      // Predicated region
      $region41: #{tpu_custom_call.1} parent=5 // pred_check
        %p3489 = pneg %p3488
      $region42: #{tpu_custom_call.1} parent=5 // pred_check_branch
        %3491 = sbr.rel (%p3489) target = $region44
      $region43: #{tpu_custom_call.1} parent=5 // pred_region
        %s3492 = ssub.s32 %s15, 2
        // Predicated region
        $region45: #{tpu_custom_call.1} parent=43 // pred_check
          %p3493 = pneg %p112
        $region46: #{tpu_custom_call.1} parent=43 // pred_check_branch
          %3495 = sbr.rel (%p3493) target = $region48
        $region47: #{tpu_custom_call.1} parent=43 // pred_region
          %s3496 = sand.u32 %s97, 1
          %s3497 = scalar_lea.sflag [#allocation5], %s3496
          %s3498 = sand.u32 %s97, 1
          %s3499 = smul.addr %s3498, 32
          %s3500 = scalar_lea.vmem [#allocation6], %s3499
          %3502 = dma.done %s3497, 512
        $region48: #{tpu_custom_call.1} parent=43 // pred_fallthru
          _
      $region44: #{tpu_custom_call.1} parent=5 // pred_fallthru
        _
    $region6: #{tpu_custom_call.1} parent=1 // loop_footer
      %s19 = sadd.s32 1, %s15
    $region7: #{tpu_custom_call.1} parent=1 // loop_footer_branch
      %14 = sbr.rel target = $region3
    $region8: #{tpu_custom_call.1} parent=1 // loop_exit
      _
    %3503 = vsyncpa [#allocation4], 1
    %s3504 = scalar_lea.sflag [#allocation4], 1
    %3505 = vsyncpa %s3504, 1
    %3506 = vsyncpa [#allocation5], 1
    %s3507 = scalar_lea.sflag [#allocation5], 1
    %3508 = vsyncpa %s3507, 1

</llo_original>
